<compile_context>
chip_gen: v6e
topology: v6e:2x2x1
jax: 0.10.0
libtpu: 0.0.40
codegen_flags: <defaults>
</compile_context>

<pallas_src>
import jax
import jax.numpy as jnp
from jax.experimental import pallas as pl
from jax.experimental.pallas import tpu as pltpu

N_LAYERS = 3
EPS = 1e-5
VMEM_LIMIT_BYTES = 32 * 1024 * 1024


def _round_up(v, m):
    return (v + m - 1) // m * m


def _layer_norm(z, gamma, beta):
    mean = jnp.mean(z, axis=-1, keepdims=True)
    var = jnp.mean((z - mean) ** 2, axis=-1, keepdims=True)
    return (z - mean) * jax.lax.rsqrt(var + EPS) * gamma + beta


def _batch_norm(h, gamma, beta):
    # nn.BatchNorm1d in training mode: biased statistics over the batch axis.
    mean = jnp.mean(h, axis=0, keepdims=True)
    var = jnp.mean((h - mean) ** 2, axis=0, keepdims=True)
    return (h - mean) * jax.lax.rsqrt(var + EPS) * gamma + beta


def _mxu_dot(a, b):
    # bf16 operands (fast MXU path on v6e/v7x; v5e MXU also takes bf16),
    # f32 accumulation.  Elementwise math around it stays f32.
    return jnp.dot(a.astype(jnp.bfloat16), b.astype(jnp.bfloat16),
                   preferred_element_type=jnp.float32)


# --------------------------------------------------------------------------
# Fused kernel: DeepNet + CrossNet + head.  Full batch resident in VMEM
# (training-mode BatchNorm requires global batch statistics per layer).
# --------------------------------------------------------------------------
def deep_cross_kernel(x_ref,
                      dw0, db0, dw1, db1, dw2, db2, dw3, db3, bng, bnb,
                      cwt_ref, cb_ref, lng_ref, lnb_ref,
                      fwc_ref, fwd_ref, fb_ref,
                      out_ref):
    x0 = x_ref[...]                                           # (B, n_in)

    # ---------------- DeepNet: 4 x [Linear -> BatchNorm -> ReLU] -----------
    h = x0
    for l, (w_ref, b_ref) in enumerate(
            [(dw0, db0), (dw1, db1), (dw2, db2), (dw3, db3)]):
        h = _mxu_dot(h, w_ref[...]) + b_ref[...]
        h = _batch_norm(h, bng[l], bnb[l])
        h = jnp.maximum(h, 0.0)
    x_deep = h                                                # (B, n_hidden)

    # ---------------- CrossNet: 3 x cross layer + LayerNorm ----------------
    x_i = x0
    for l in range(N_LAYERS):
        # (W @ x_i.T + b).T == x_i @ W.T + b_row ; cwt_ref stores W.T stacked.
        x_w = _mxu_dot(x_i, cwt_ref[l]) + cb_ref[l]
        z = x0 * x_w + x_i
        x_i = _layer_norm(z, lng_ref[l], lnb_ref[l])
    x_cross = x_i                                             # (B, n_in)

    # -------- head: Linear over cat([x_cross, x_deep]) + Sigmoid -----------
    # Concat folded into two matmuls with a split weight (no in-kernel concat).
    # Output width padded to a lane-dense multiple of 128 (unmasked stores).
    logits = (_mxu_dot(x_cross, fwc_ref[...])
              + _mxu_dot(x_deep, fwd_ref[...])
              + fb_ref[...])
    out_ref[...] = jax.nn.sigmoid(logits)


# --------------------------------------------------------------------------
# Wrapper
# --------------------------------------------------------------------------
def deep_cross_net(x, p):
    B, _ = x.shape
    out_pad = p["final_b"].shape[-1]
    n_out = p["n_output"]

    vmem = pl.BlockSpec(memory_space=pltpu.MemorySpace.VMEM)

    args = (x,
            p["deep_W0t"], p["deep_b0"], p["deep_W1t"], p["deep_b1"],
            p["deep_W2t"], p["deep_b2"], p["deep_W3t"], p["deep_b3"],
            p["bn_g"], p["bn_b"],
            p["cross_Wt"], p["cross_b"], p["ln_g"], p["ln_b"],
            p["final_Wct"], p["final_Wdt"], p["final_b"])

    out_padded = pl.pallas_call(
        deep_cross_kernel,
        out_shape=jax.ShapeDtypeStruct((B, out_pad), jnp.float32),
        in_specs=[vmem] * len(args),
        out_specs=vmem,
        compiler_params=pltpu.CompilerParams(vmem_limit_bytes=VMEM_LIMIT_BYTES),
    )(*args)

    return out_padded[:, :n_out]


# --------------------------------------------------------------------------
# Pure-JAX reference mirroring the PyTorch forward (f32 everywhere).
# --------------------------------------------------------------------------
def reference(x, p):
    x0 = x
    x_i = x
    for l in range(N_LAYERS):
        x_w = x_i @ p["cross_Wt"][l] + p["cross_b"][l]
        z = x0 * x_w + x_i
        mean = z.mean(-1, keepdims=True)
        var = ((z - mean) ** 2).mean(-1, keepdims=True)
        x_i = (z - mean) / jnp.sqrt(var + EPS) * p["ln_g"][l] + p["ln_b"][l]
    x_cross = x_i

    h = x
    hidden = [("deep_W0t", "deep_b0"), ("deep_W1t", "deep_b1"),
              ("deep_W2t", "deep_b2"), ("deep_W3t", "deep_b3")]
    for l, (wn, bn) in enumerate(hidden):
        h = h @ p[wn] + p[bn]
        mean = h.mean(0, keepdims=True)
        var = ((h - mean) ** 2).mean(0, keepdims=True)
        h = (h - mean) / jnp.sqrt(var + EPS) * p["bn_g"][l] + p["bn_b"][l]
        h = jnp.maximum(h, 0.0)
    x_deep = h

    logits = x_cross @ p["final_Wct"] + x_deep @ p["final_Wdt"] + p["final_b"]
    return jax.nn.sigmoid(logits)[:, :p["n_output"]]


def init_params(key, n_input, n_hidden, n_output):
    """Params stored directly in kernel layout (pre-transposed, head padded)."""
    out_pad = _round_up(max(n_output, 128), 128)     # lane-dense head width
    ks = jax.random.split(key, 12)
    f32 = jnp.float32
    s_in = 1.0 / jnp.sqrt(n_input)
    s_hid = 1.0 / jnp.sqrt(n_hidden)
    s_cat = 1.0 / jnp.sqrt(n_input + n_hidden)
    wc = jax.random.normal(ks[10], (n_input, n_output), f32) * s_cat
    wd = jax.random.normal(ks[11], (n_hidden, n_output), f32) * s_cat
    return {
        "n_output": n_output,
        # CrossNet: torch.randn weights (stored as W.T stacked), biases as rows,
        # LayerNorm affine = (1, 0).
        "cross_Wt": jax.random.normal(ks[0], (N_LAYERS, n_input, n_input), f32),
        "cross_b": jax.random.normal(ks[1], (N_LAYERS, 1, n_input), f32),
        "ln_g": jnp.ones((N_LAYERS, 1, n_input), f32),
        "ln_b": jnp.zeros((N_LAYERS, 1, n_input), f32),
        # DeepNet linears stored (in, out); BatchNorm affine = (1, 0).
        "deep_W0t": jax.random.normal(ks[2], (n_input, n_hidden), f32) * s_in,
        "deep_b0": jax.random.normal(ks[3], (1, n_hidden), f32) * 0.1,
        "deep_W1t": jax.random.normal(ks[4], (n_hidden, n_hidden), f32) * s_hid,
        "deep_b1": jax.random.normal(ks[5], (1, n_hidden), f32) * 0.1,
        "deep_W2t": jax.random.normal(ks[6], (n_hidden, n_hidden), f32) * s_hid,
        "deep_b2": jax.random.normal(ks[7], (1, n_hidden), f32) * 0.1,
        "deep_W3t": jax.random.normal(ks[8], (n_hidden, n_hidden), f32) * s_hid,
        "deep_b3": jax.random.normal(ks[9], (1, n_hidden), f32) * 0.1,
        "bn_g": jnp.ones((N_LAYERS + 1, 1, n_hidden), f32),
        "bn_b": jnp.zeros((N_LAYERS + 1, 1, n_hidden), f32),
        # Head Linear split over the concat, transposed AND zero-padded to a
        # lane-dense output width (only the first n_output columns are nonzero).
        "final_Wct": jnp.zeros((n_input, out_pad), f32).at[:, :n_output].set(wc),
        "final_Wdt": jnp.zeros((n_hidden, out_pad), f32).at[:, :n_output].set(wd),
        "final_b": jnp.zeros((1, out_pad), f32),
    }


if __name__ == "__main__":
    B, N_INPUT, N_HIDDEN, N_OUTPUT = 64, 16, 128, 8

    key = jax.random.PRNGKey(0)
    k_x, k_p = jax.random.split(key)
    x = jax.random.normal(k_x, (B, N_INPUT), jnp.float32)
    params = init_params(k_p, N_INPUT, N_HIDDEN, N_OUTPUT)

    out = jax.block_until_ready(deep_cross_net(x, params))
    ref = jax.block_until_ready(reference(x, params))

    assert out.shape == (B, N_OUTPUT)
    assert bool(jnp.all(jnp.isfinite(out)))
    max_err = float(jnp.max(jnp.abs(out - ref)))
    # bf16 MXU operands with f32 accumulation vs a pure-f32 reference.
    assert jnp.allclose(out, ref, atol=2.5e-2, rtol=2.5e-2), (
        f"max abs diff {max_err}"
    )
    print("KERNEL_OK")
</pallas_src>

<mosaic_0001>
module attributes {stable_mosaic.version = 11 : i64} {
  func.func @deep_cross_kernel(%arg0: memref<64x16xf32, #tpu.memory_space<vmem>>, %arg1: memref<16x128xf32, #tpu.memory_space<vmem>>, %arg2: memref<1x128xf32, #tpu.memory_space<vmem>>, %arg3: memref<128x128xf32, #tpu.memory_space<vmem>>, %arg4: memref<1x128xf32, #tpu.memory_space<vmem>>, %arg5: memref<128x128xf32, #tpu.memory_space<vmem>>, %arg6: memref<1x128xf32, #tpu.memory_space<vmem>>, %arg7: memref<128x128xf32, #tpu.memory_space<vmem>>, %arg8: memref<1x128xf32, #tpu.memory_space<vmem>>, %arg9: memref<4x1x128xf32, #tpu.memory_space<vmem>>, %arg10: memref<4x1x128xf32, #tpu.memory_space<vmem>>, %arg11: memref<3x16x16xf32, #tpu.memory_space<vmem>>, %arg12: memref<3x1x16xf32, #tpu.memory_space<vmem>>, %arg13: memref<3x1x16xf32, #tpu.memory_space<vmem>>, %arg14: memref<3x1x16xf32, #tpu.memory_space<vmem>>, %arg15: memref<16x128xf32, #tpu.memory_space<vmem>>, %arg16: memref<128x128xf32, #tpu.memory_space<vmem>>, %arg17: memref<1x128xf32, #tpu.memory_space<vmem>>, %arg18: memref<64x128xf32, #tpu.memory_space<vmem>>) attributes {dimension_semantics = [], scalar_prefetch = 0 : i64, scratch_operands = 0 : i64, tpu.core_type = #tpu.core_type<tc>} {
    %c0 = arith.constant 0 : index
    %c0_0 = arith.constant 0 : index
    %0 = vector.load %arg0[%c0, %c0_0] : memref<64x16xf32, #tpu.memory_space<vmem>>, vector<64x16xf32>
    %c0_1 = arith.constant 0 : index
    %c0_2 = arith.constant 0 : index
    %1 = vector.load %arg1[%c0_1, %c0_2] : memref<16x128xf32, #tpu.memory_space<vmem>>, vector<16x128xf32>
    %2 = arith.truncf %0 : vector<64x16xf32> to vector<64x16xbf16>
    %3 = arith.truncf %1 : vector<16x128xf32> to vector<16x128xbf16>
    %cst = arith.constant dense<0.000000e+00> : vector<64x128xf32>
    %4 = tpu.matmul %2, %3, %cst {dimension_numbers = #tpu.dot_dimension_numbers<[1], [0], [0], [1], [0, 0, 1, 1], [], []>} : vector<64x16xbf16>, vector<16x128xbf16>, vector<64x128xf32> -> vector<64x128xf32>
    %c0_3 = arith.constant 0 : index
    %c0_4 = arith.constant 0 : index
    %5 = vector.load %arg2[%c0_3, %c0_4] : memref<1x128xf32, #tpu.memory_space<vmem>>, vector<1x128xf32>
    %6 = vector.broadcast %5 : vector<1x128xf32> to vector<64x128xf32>
    %7 = arith.addf %4, %6 : vector<64x128xf32>
    %c0_5 = arith.constant 0 : index
    %c0_6 = arith.constant 0 : index
    %c0_7 = arith.constant 0 : index
    %8 = vector.load %arg9[%c0_5, %c0_6, %c0_7] : memref<4x1x128xf32, #tpu.memory_space<vmem>>, vector<1x1x128xf32>
    %9 = vector.shape_cast %8 : vector<1x1x128xf32> to vector<1x128xf32>
    %c0_8 = arith.constant 0 : index
    %c0_9 = arith.constant 0 : index
    %c0_10 = arith.constant 0 : index
    %10 = vector.load %arg10[%c0_8, %c0_9, %c0_10] : memref<4x1x128xf32, #tpu.memory_space<vmem>>, vector<1x1x128xf32>
    %11 = vector.shape_cast %10 : vector<1x1x128xf32> to vector<1x128xf32>
    %cst_11 = arith.constant dense<0.000000e+00> : vector<128xf32>
    %12 = vector.multi_reduction <add>, %7, %cst_11 [0] : vector<64x128xf32> to vector<128xf32>
    %13 = vector.shape_cast %12 : vector<128xf32> to vector<1x128xf32>
    %cst_12 = arith.constant 6.400000e+01 : f32
    %14 = vector.broadcast %cst_12 : f32 to vector<1x128xf32>
    %15 = arith.divf %13, %14 : vector<1x128xf32>
    %16 = vector.broadcast %15 : vector<1x128xf32> to vector<64x128xf32>
    %17 = arith.subf %7, %16 : vector<64x128xf32>
    %18 = arith.mulf %17, %17 : vector<64x128xf32>
    %cst_13 = arith.constant dense<0.000000e+00> : vector<128xf32>
    %19 = vector.multi_reduction <add>, %18, %cst_13 [0] : vector<64x128xf32> to vector<128xf32>
    %20 = vector.shape_cast %19 : vector<128xf32> to vector<1x128xf32>
    %cst_14 = arith.constant 6.400000e+01 : f32
    %21 = vector.broadcast %cst_14 : f32 to vector<1x128xf32>
    %22 = arith.divf %20, %21 : vector<1x128xf32>
    %23 = vector.broadcast %15 : vector<1x128xf32> to vector<64x128xf32>
    %24 = arith.subf %7, %23 : vector<64x128xf32>
    %cst_15 = arith.constant 9.99999974E-6 : f32
    %25 = vector.broadcast %cst_15 : f32 to vector<1x128xf32>
    %26 = arith.addf %22, %25 : vector<1x128xf32>
    %27 = math.rsqrt %26 : vector<1x128xf32>
    %28 = vector.broadcast %27 : vector<1x128xf32> to vector<64x128xf32>
    %29 = arith.mulf %24, %28 : vector<64x128xf32>
    %30 = vector.broadcast %9 : vector<1x128xf32> to vector<64x128xf32>
    %31 = arith.mulf %29, %30 : vector<64x128xf32>
    %32 = vector.broadcast %11 : vector<1x128xf32> to vector<64x128xf32>
    %33 = arith.addf %31, %32 : vector<64x128xf32>
    %cst_16 = arith.constant 0.000000e+00 : f32
    %34 = vector.broadcast %cst_16 : f32 to vector<64x128xf32>
    %35 = arith.maximumf %33, %34 : vector<64x128xf32>
    %c0_17 = arith.constant 0 : index
    %c0_18 = arith.constant 0 : index
    %36 = vector.load %arg3[%c0_17, %c0_18] : memref<128x128xf32, #tpu.memory_space<vmem>>, vector<128x128xf32>
    %37 = arith.truncf %35 : vector<64x128xf32> to vector<64x128xbf16>
    %38 = arith.truncf %36 : vector<128x128xf32> to vector<128x128xbf16>
    %cst_19 = arith.constant dense<0.000000e+00> : vector<64x128xf32>
    %39 = tpu.matmul %37, %38, %cst_19 {dimension_numbers = #tpu.dot_dimension_numbers<[1], [0], [0], [1], [0, 0, 1, 1], [], []>} : vector<64x128xbf16>, vector<128x128xbf16>, vector<64x128xf32> -> vector<64x128xf32>
    %c0_20 = arith.constant 0 : index
    %c0_21 = arith.constant 0 : index
    %40 = vector.load %arg4[%c0_20, %c0_21] : memref<1x128xf32, #tpu.memory_space<vmem>>, vector<1x128xf32>
    %41 = vector.broadcast %40 : vector<1x128xf32> to vector<64x128xf32>
    %42 = arith.addf %39, %41 : vector<64x128xf32>
    %c1 = arith.constant 1 : index
    %c0_22 = arith.constant 0 : index
    %c0_23 = arith.constant 0 : index
    %43 = vector.load %arg9[%c1, %c0_22, %c0_23] : memref<4x1x128xf32, #tpu.memory_space<vmem>>, vector<1x1x128xf32>
    %44 = vector.shape_cast %43 : vector<1x1x128xf32> to vector<1x128xf32>
    %c1_24 = arith.constant 1 : index
    %c0_25 = arith.constant 0 : index
    %c0_26 = arith.constant 0 : index
    %45 = vector.load %arg10[%c1_24, %c0_25, %c0_26] : memref<4x1x128xf32, #tpu.memory_space<vmem>>, vector<1x1x128xf32>
    %46 = vector.shape_cast %45 : vector<1x1x128xf32> to vector<1x128xf32>
    %cst_27 = arith.constant dense<0.000000e+00> : vector<128xf32>
    %47 = vector.multi_reduction <add>, %42, %cst_27 [0] : vector<64x128xf32> to vector<128xf32>
    %48 = vector.shape_cast %47 : vector<128xf32> to vector<1x128xf32>
    %cst_28 = arith.constant 6.400000e+01 : f32
    %49 = vector.broadcast %cst_28 : f32 to vector<1x128xf32>
    %50 = arith.divf %48, %49 : vector<1x128xf32>
    %51 = vector.broadcast %50 : vector<1x128xf32> to vector<64x128xf32>
    %52 = arith.subf %42, %51 : vector<64x128xf32>
    %53 = arith.mulf %52, %52 : vector<64x128xf32>
    %cst_29 = arith.constant dense<0.000000e+00> : vector<128xf32>
    %54 = vector.multi_reduction <add>, %53, %cst_29 [0] : vector<64x128xf32> to vector<128xf32>
    %55 = vector.shape_cast %54 : vector<128xf32> to vector<1x128xf32>
    %cst_30 = arith.constant 6.400000e+01 : f32
    %56 = vector.broadcast %cst_30 : f32 to vector<1x128xf32>
    %57 = arith.divf %55, %56 : vector<1x128xf32>
    %58 = vector.broadcast %50 : vector<1x128xf32> to vector<64x128xf32>
    %59 = arith.subf %42, %58 : vector<64x128xf32>
    %cst_31 = arith.constant 9.99999974E-6 : f32
    %60 = vector.broadcast %cst_31 : f32 to vector<1x128xf32>
    %61 = arith.addf %57, %60 : vector<1x128xf32>
    %62 = math.rsqrt %61 : vector<1x128xf32>
    %63 = vector.broadcast %62 : vector<1x128xf32> to vector<64x128xf32>
    %64 = arith.mulf %59, %63 : vector<64x128xf32>
    %65 = vector.broadcast %44 : vector<1x128xf32> to vector<64x128xf32>
    %66 = arith.mulf %64, %65 : vector<64x128xf32>
    %67 = vector.broadcast %46 : vector<1x128xf32> to vector<64x128xf32>
    %68 = arith.addf %66, %67 : vector<64x128xf32>
    %cst_32 = arith.constant 0.000000e+00 : f32
    %69 = vector.broadcast %cst_32 : f32 to vector<64x128xf32>
    %70 = arith.maximumf %68, %69 : vector<64x128xf32>
    %c0_33 = arith.constant 0 : index
    %c0_34 = arith.constant 0 : index
    %71 = vector.load %arg5[%c0_33, %c0_34] : memref<128x128xf32, #tpu.memory_space<vmem>>, vector<128x128xf32>
    %72 = arith.truncf %70 : vector<64x128xf32> to vector<64x128xbf16>
    %73 = arith.truncf %71 : vector<128x128xf32> to vector<128x128xbf16>
    %cst_35 = arith.constant dense<0.000000e+00> : vector<64x128xf32>
    %74 = tpu.matmul %72, %73, %cst_35 {dimension_numbers = #tpu.dot_dimension_numbers<[1], [0], [0], [1], [0, 0, 1, 1], [], []>} : vector<64x128xbf16>, vector<128x128xbf16>, vector<64x128xf32> -> vector<64x128xf32>
    %c0_36 = arith.constant 0 : index
    %c0_37 = arith.constant 0 : index
    %75 = vector.load %arg6[%c0_36, %c0_37] : memref<1x128xf32, #tpu.memory_space<vmem>>, vector<1x128xf32>
    %76 = vector.broadcast %75 : vector<1x128xf32> to vector<64x128xf32>
    %77 = arith.addf %74, %76 : vector<64x128xf32>
    %c2 = arith.constant 2 : index
    %c0_38 = arith.constant 0 : index
    %c0_39 = arith.constant 0 : index
    %78 = vector.load %arg9[%c2, %c0_38, %c0_39] : memref<4x1x128xf32, #tpu.memory_space<vmem>>, vector<1x1x128xf32>
    %79 = vector.shape_cast %78 : vector<1x1x128xf32> to vector<1x128xf32>
    %c2_40 = arith.constant 2 : index
    %c0_41 = arith.constant 0 : index
    %c0_42 = arith.constant 0 : index
    %80 = vector.load %arg10[%c2_40, %c0_41, %c0_42] : memref<4x1x128xf32, #tpu.memory_space<vmem>>, vector<1x1x128xf32>
    %81 = vector.shape_cast %80 : vector<1x1x128xf32> to vector<1x128xf32>
    %cst_43 = arith.constant dense<0.000000e+00> : vector<128xf32>
    %82 = vector.multi_reduction <add>, %77, %cst_43 [0] : vector<64x128xf32> to vector<128xf32>
    %83 = vector.shape_cast %82 : vector<128xf32> to vector<1x128xf32>
    %cst_44 = arith.constant 6.400000e+01 : f32
    %84 = vector.broadcast %cst_44 : f32 to vector<1x128xf32>
    %85 = arith.divf %83, %84 : vector<1x128xf32>
    %86 = vector.broadcast %85 : vector<1x128xf32> to vector<64x128xf32>
    %87 = arith.subf %77, %86 : vector<64x128xf32>
    %88 = arith.mulf %87, %87 : vector<64x128xf32>
    %cst_45 = arith.constant dense<0.000000e+00> : vector<128xf32>
    %89 = vector.multi_reduction <add>, %88, %cst_45 [0] : vector<64x128xf32> to vector<128xf32>
    %90 = vector.shape_cast %89 : vector<128xf32> to vector<1x128xf32>
    %cst_46 = arith.constant 6.400000e+01 : f32
    %91 = vector.broadcast %cst_46 : f32 to vector<1x128xf32>
    %92 = arith.divf %90, %91 : vector<1x128xf32>
    %93 = vector.broadcast %85 : vector<1x128xf32> to vector<64x128xf32>
    %94 = arith.subf %77, %93 : vector<64x128xf32>
    %cst_47 = arith.constant 9.99999974E-6 : f32
    %95 = vector.broadcast %cst_47 : f32 to vector<1x128xf32>
    %96 = arith.addf %92, %95 : vector<1x128xf32>
    %97 = math.rsqrt %96 : vector<1x128xf32>
    %98 = vector.broadcast %97 : vector<1x128xf32> to vector<64x128xf32>
    %99 = arith.mulf %94, %98 : vector<64x128xf32>
    %100 = vector.broadcast %79 : vector<1x128xf32> to vector<64x128xf32>
    %101 = arith.mulf %99, %100 : vector<64x128xf32>
    %102 = vector.broadcast %81 : vector<1x128xf32> to vector<64x128xf32>
    %103 = arith.addf %101, %102 : vector<64x128xf32>
    %cst_48 = arith.constant 0.000000e+00 : f32
    %104 = vector.broadcast %cst_48 : f32 to vector<64x128xf32>
    %105 = arith.maximumf %103, %104 : vector<64x128xf32>
    %c0_49 = arith.constant 0 : index
    %c0_50 = arith.constant 0 : index
    %106 = vector.load %arg7[%c0_49, %c0_50] : memref<128x128xf32, #tpu.memory_space<vmem>>, vector<128x128xf32>
    %107 = arith.truncf %105 : vector<64x128xf32> to vector<64x128xbf16>
    %108 = arith.truncf %106 : vector<128x128xf32> to vector<128x128xbf16>
    %cst_51 = arith.constant dense<0.000000e+00> : vector<64x128xf32>
    %109 = tpu.matmul %107, %108, %cst_51 {dimension_numbers = #tpu.dot_dimension_numbers<[1], [0], [0], [1], [0, 0, 1, 1], [], []>} : vector<64x128xbf16>, vector<128x128xbf16>, vector<64x128xf32> -> vector<64x128xf32>
    %c0_52 = arith.constant 0 : index
    %c0_53 = arith.constant 0 : index
    %110 = vector.load %arg8[%c0_52, %c0_53] : memref<1x128xf32, #tpu.memory_space<vmem>>, vector<1x128xf32>
    %111 = vector.broadcast %110 : vector<1x128xf32> to vector<64x128xf32>
    %112 = arith.addf %109, %111 : vector<64x128xf32>
    %c3 = arith.constant 3 : index
    %c0_54 = arith.constant 0 : index
    %c0_55 = arith.constant 0 : index
    %113 = vector.load %arg9[%c3, %c0_54, %c0_55] : memref<4x1x128xf32, #tpu.memory_space<vmem>>, vector<1x1x128xf32>
    %114 = vector.shape_cast %113 : vector<1x1x128xf32> to vector<1x128xf32>
    %c3_56 = arith.constant 3 : index
    %c0_57 = arith.constant 0 : index
    %c0_58 = arith.constant 0 : index
    %115 = vector.load %arg10[%c3_56, %c0_57, %c0_58] : memref<4x1x128xf32, #tpu.memory_space<vmem>>, vector<1x1x128xf32>
    %116 = vector.shape_cast %115 : vector<1x1x128xf32> to vector<1x128xf32>
    %cst_59 = arith.constant dense<0.000000e+00> : vector<128xf32>
    %117 = vector.multi_reduction <add>, %112, %cst_59 [0] : vector<64x128xf32> to vector<128xf32>
    %118 = vector.shape_cast %117 : vector<128xf32> to vector<1x128xf32>
    %cst_60 = arith.constant 6.400000e+01 : f32
    %119 = vector.broadcast %cst_60 : f32 to vector<1x128xf32>
    %120 = arith.divf %118, %119 : vector<1x128xf32>
    %121 = vector.broadcast %120 : vector<1x128xf32> to vector<64x128xf32>
    %122 = arith.subf %112, %121 : vector<64x128xf32>
    %123 = arith.mulf %122, %122 : vector<64x128xf32>
    %cst_61 = arith.constant dense<0.000000e+00> : vector<128xf32>
    %124 = vector.multi_reduction <add>, %123, %cst_61 [0] : vector<64x128xf32> to vector<128xf32>
    %125 = vector.shape_cast %124 : vector<128xf32> to vector<1x128xf32>
    %cst_62 = arith.constant 6.400000e+01 : f32
    %126 = vector.broadcast %cst_62 : f32 to vector<1x128xf32>
    %127 = arith.divf %125, %126 : vector<1x128xf32>
    %128 = vector.broadcast %120 : vector<1x128xf32> to vector<64x128xf32>
    %129 = arith.subf %112, %128 : vector<64x128xf32>
    %cst_63 = arith.constant 9.99999974E-6 : f32
    %130 = vector.broadcast %cst_63 : f32 to vector<1x128xf32>
    %131 = arith.addf %127, %130 : vector<1x128xf32>
    %132 = math.rsqrt %131 : vector<1x128xf32>
    %133 = vector.broadcast %132 : vector<1x128xf32> to vector<64x128xf32>
    %134 = arith.mulf %129, %133 : vector<64x128xf32>
    %135 = vector.broadcast %114 : vector<1x128xf32> to vector<64x128xf32>
    %136 = arith.mulf %134, %135 : vector<64x128xf32>
    %137 = vector.broadcast %116 : vector<1x128xf32> to vector<64x128xf32>
    %138 = arith.addf %136, %137 : vector<64x128xf32>
    %cst_64 = arith.constant 0.000000e+00 : f32
    %139 = vector.broadcast %cst_64 : f32 to vector<64x128xf32>
    %140 = arith.maximumf %138, %139 : vector<64x128xf32>
    %c0_65 = arith.constant 0 : index
    %c0_66 = arith.constant 0 : index
    %c0_67 = arith.constant 0 : index
    %141 = vector.load %arg11[%c0_65, %c0_66, %c0_67] : memref<3x16x16xf32, #tpu.memory_space<vmem>>, vector<1x16x16xf32>
    %142 = vector.shape_cast %141 : vector<1x16x16xf32> to vector<16x16xf32>
    %143 = arith.truncf %0 : vector<64x16xf32> to vector<64x16xbf16>
    %144 = arith.truncf %142 : vector<16x16xf32> to vector<16x16xbf16>
    %cst_68 = arith.constant dense<0.000000e+00> : vector<64x16xf32>
    %145 = tpu.matmul %143, %144, %cst_68 {dimension_numbers = #tpu.dot_dimension_numbers<[1], [0], [0], [1], [0, 0, 1, 1], [], []>} : vector<64x16xbf16>, vector<16x16xbf16>, vector<64x16xf32> -> vector<64x16xf32>
    %c0_69 = arith.constant 0 : index
    %c0_70 = arith.constant 0 : index
    %c0_71 = arith.constant 0 : index
    %146 = vector.load %arg12[%c0_69, %c0_70, %c0_71] : memref<3x1x16xf32, #tpu.memory_space<vmem>>, vector<1x1x16xf32>
    %147 = vector.shape_cast %146 : vector<1x1x16xf32> to vector<1x16xf32>
    %148 = vector.broadcast %147 : vector<1x16xf32> to vector<64x16xf32>
    %149 = arith.addf %145, %148 : vector<64x16xf32>
    %150 = arith.mulf %0, %149 : vector<64x16xf32>
    %151 = arith.addf %150, %0 : vector<64x16xf32>
    %c0_72 = arith.constant 0 : index
    %c0_73 = arith.constant 0 : index
    %c0_74 = arith.constant 0 : index
    %152 = vector.load %arg13[%c0_72, %c0_73, %c0_74] : memref<3x1x16xf32, #tpu.memory_space<vmem>>, vector<1x1x16xf32>
    %153 = vector.shape_cast %152 : vector<1x1x16xf32> to vector<1x16xf32>
    %c0_75 = arith.constant 0 : index
    %c0_76 = arith.constant 0 : index
    %c0_77 = arith.constant 0 : index
    %154 = vector.load %arg14[%c0_75, %c0_76, %c0_77] : memref<3x1x16xf32, #tpu.memory_space<vmem>>, vector<1x1x16xf32>
    %155 = vector.shape_cast %154 : vector<1x1x16xf32> to vector<1x16xf32>
    %cst_78 = arith.constant dense<0.000000e+00> : vector<64xf32>
    %156 = vector.multi_reduction <add>, %151, %cst_78 [1] : vector<64x16xf32> to vector<64xf32>
    %157 = vector.shape_cast %156 : vector<64xf32> to vector<64x1xf32>
    %cst_79 = arith.constant 1.600000e+01 : f32
    %158 = vector.broadcast %cst_79 : f32 to vector<64x1xf32>
    %159 = arith.divf %157, %158 : vector<64x1xf32>
    %160 = vector.broadcast %159 : vector<64x1xf32> to vector<64x16xf32>
    %161 = arith.subf %151, %160 : vector<64x16xf32>
    %162 = arith.mulf %161, %161 : vector<64x16xf32>
    %cst_80 = arith.constant dense<0.000000e+00> : vector<64xf32>
    %163 = vector.multi_reduction <add>, %162, %cst_80 [1] : vector<64x16xf32> to vector<64xf32>
    %164 = vector.shape_cast %163 : vector<64xf32> to vector<64x1xf32>
    %cst_81 = arith.constant 1.600000e+01 : f32
    %165 = vector.broadcast %cst_81 : f32 to vector<64x1xf32>
    %166 = arith.divf %164, %165 : vector<64x1xf32>
    %167 = vector.broadcast %159 : vector<64x1xf32> to vector<64x16xf32>
    %168 = arith.subf %151, %167 : vector<64x16xf32>
    %cst_82 = arith.constant 9.99999974E-6 : f32
    %169 = vector.broadcast %cst_82 : f32 to vector<64x1xf32>
    %170 = arith.addf %166, %169 : vector<64x1xf32>
    %171 = math.rsqrt %170 : vector<64x1xf32>
    %172 = vector.broadcast %171 : vector<64x1xf32> to vector<64x16xf32>
    %173 = arith.mulf %168, %172 : vector<64x16xf32>
    %174 = vector.broadcast %153 : vector<1x16xf32> to vector<64x16xf32>
    %175 = arith.mulf %173, %174 : vector<64x16xf32>
    %176 = vector.broadcast %155 : vector<1x16xf32> to vector<64x16xf32>
    %177 = arith.addf %175, %176 : vector<64x16xf32>
    %c1_83 = arith.constant 1 : index
    %c0_84 = arith.constant 0 : index
    %c0_85 = arith.constant 0 : index
    %178 = vector.load %arg11[%c1_83, %c0_84, %c0_85] : memref<3x16x16xf32, #tpu.memory_space<vmem>>, vector<1x16x16xf32>
    %179 = vector.shape_cast %178 : vector<1x16x16xf32> to vector<16x16xf32>
    %180 = arith.truncf %177 : vector<64x16xf32> to vector<64x16xbf16>
    %181 = arith.truncf %179 : vector<16x16xf32> to vector<16x16xbf16>
    %cst_86 = arith.constant dense<0.000000e+00> : vector<64x16xf32>
    %182 = tpu.matmul %180, %181, %cst_86 {dimension_numbers = #tpu.dot_dimension_numbers<[1], [0], [0], [1], [0, 0, 1, 1], [], []>} : vector<64x16xbf16>, vector<16x16xbf16>, vector<64x16xf32> -> vector<64x16xf32>
    %c1_87 = arith.constant 1 : index
    %c0_88 = arith.constant 0 : index
    %c0_89 = arith.constant 0 : index
    %183 = vector.load %arg12[%c1_87, %c0_88, %c0_89] : memref<3x1x16xf32, #tpu.memory_space<vmem>>, vector<1x1x16xf32>
    %184 = vector.shape_cast %183 : vector<1x1x16xf32> to vector<1x16xf32>
    %185 = vector.broadcast %184 : vector<1x16xf32> to vector<64x16xf32>
    %186 = arith.addf %182, %185 : vector<64x16xf32>
    %187 = arith.mulf %0, %186 : vector<64x16xf32>
    %188 = arith.addf %187, %177 : vector<64x16xf32>
    %c1_90 = arith.constant 1 : index
    %c0_91 = arith.constant 0 : index
    %c0_92 = arith.constant 0 : index
    %189 = vector.load %arg13[%c1_90, %c0_91, %c0_92] : memref<3x1x16xf32, #tpu.memory_space<vmem>>, vector<1x1x16xf32>
    %190 = vector.shape_cast %189 : vector<1x1x16xf32> to vector<1x16xf32>
    %c1_93 = arith.constant 1 : index
    %c0_94 = arith.constant 0 : index
    %c0_95 = arith.constant 0 : index
    %191 = vector.load %arg14[%c1_93, %c0_94, %c0_95] : memref<3x1x16xf32, #tpu.memory_space<vmem>>, vector<1x1x16xf32>
    %192 = vector.shape_cast %191 : vector<1x1x16xf32> to vector<1x16xf32>
    %cst_96 = arith.constant dense<0.000000e+00> : vector<64xf32>
    %193 = vector.multi_reduction <add>, %188, %cst_96 [1] : vector<64x16xf32> to vector<64xf32>
    %194 = vector.shape_cast %193 : vector<64xf32> to vector<64x1xf32>
    %cst_97 = arith.constant 1.600000e+01 : f32
    %195 = vector.broadcast %cst_97 : f32 to vector<64x1xf32>
    %196 = arith.divf %194, %195 : vector<64x1xf32>
    %197 = vector.broadcast %196 : vector<64x1xf32> to vector<64x16xf32>
    %198 = arith.subf %188, %197 : vector<64x16xf32>
    %199 = arith.mulf %198, %198 : vector<64x16xf32>
    %cst_98 = arith.constant dense<0.000000e+00> : vector<64xf32>
    %200 = vector.multi_reduction <add>, %199, %cst_98 [1] : vector<64x16xf32> to vector<64xf32>
    %201 = vector.shape_cast %200 : vector<64xf32> to vector<64x1xf32>
    %cst_99 = arith.constant 1.600000e+01 : f32
    %202 = vector.broadcast %cst_99 : f32 to vector<64x1xf32>
    %203 = arith.divf %201, %202 : vector<64x1xf32>
    %204 = vector.broadcast %196 : vector<64x1xf32> to vector<64x16xf32>
    %205 = arith.subf %188, %204 : vector<64x16xf32>
    %cst_100 = arith.constant 9.99999974E-6 : f32
    %206 = vector.broadcast %cst_100 : f32 to vector<64x1xf32>
    %207 = arith.addf %203, %206 : vector<64x1xf32>
    %208 = math.rsqrt %207 : vector<64x1xf32>
    %209 = vector.broadcast %208 : vector<64x1xf32> to vector<64x16xf32>
    %210 = arith.mulf %205, %209 : vector<64x16xf32>
    %211 = vector.broadcast %190 : vector<1x16xf32> to vector<64x16xf32>
    %212 = arith.mulf %210, %211 : vector<64x16xf32>
    %213 = vector.broadcast %192 : vector<1x16xf32> to vector<64x16xf32>
    %214 = arith.addf %212, %213 : vector<64x16xf32>
    %c2_101 = arith.constant 2 : index
    %c0_102 = arith.constant 0 : index
    %c0_103 = arith.constant 0 : index
    %215 = vector.load %arg11[%c2_101, %c0_102, %c0_103] : memref<3x16x16xf32, #tpu.memory_space<vmem>>, vector<1x16x16xf32>
    %216 = vector.shape_cast %215 : vector<1x16x16xf32> to vector<16x16xf32>
    %217 = arith.truncf %214 : vector<64x16xf32> to vector<64x16xbf16>
    %218 = arith.truncf %216 : vector<16x16xf32> to vector<16x16xbf16>
    %cst_104 = arith.constant dense<0.000000e+00> : vector<64x16xf32>
    %219 = tpu.matmul %217, %218, %cst_104 {dimension_numbers = #tpu.dot_dimension_numbers<[1], [0], [0], [1], [0, 0, 1, 1], [], []>} : vector<64x16xbf16>, vector<16x16xbf16>, vector<64x16xf32> -> vector<64x16xf32>
    %c2_105 = arith.constant 2 : index
    %c0_106 = arith.constant 0 : index
    %c0_107 = arith.constant 0 : index
    %220 = vector.load %arg12[%c2_105, %c0_106, %c0_107] : memref<3x1x16xf32, #tpu.memory_space<vmem>>, vector<1x1x16xf32>
    %221 = vector.shape_cast %220 : vector<1x1x16xf32> to vector<1x16xf32>
    %222 = vector.broadcast %221 : vector<1x16xf32> to vector<64x16xf32>
    %223 = arith.addf %219, %222 : vector<64x16xf32>
    %224 = arith.mulf %0, %223 : vector<64x16xf32>
    %225 = arith.addf %224, %214 : vector<64x16xf32>
    %c2_108 = arith.constant 2 : index
    %c0_109 = arith.constant 0 : index
    %c0_110 = arith.constant 0 : index
    %226 = vector.load %arg13[%c2_108, %c0_109, %c0_110] : memref<3x1x16xf32, #tpu.memory_space<vmem>>, vector<1x1x16xf32>
    %227 = vector.shape_cast %226 : vector<1x1x16xf32> to vector<1x16xf32>
    %c2_111 = arith.constant 2 : index
    %c0_112 = arith.constant 0 : index
    %c0_113 = arith.constant 0 : index
    %228 = vector.load %arg14[%c2_111, %c0_112, %c0_113] : memref<3x1x16xf32, #tpu.memory_space<vmem>>, vector<1x1x16xf32>
    %229 = vector.shape_cast %228 : vector<1x1x16xf32> to vector<1x16xf32>
    %cst_114 = arith.constant dense<0.000000e+00> : vector<64xf32>
    %230 = vector.multi_reduction <add>, %225, %cst_114 [1] : vector<64x16xf32> to vector<64xf32>
    %231 = vector.shape_cast %230 : vector<64xf32> to vector<64x1xf32>
    %cst_115 = arith.constant 1.600000e+01 : f32
    %232 = vector.broadcast %cst_115 : f32 to vector<64x1xf32>
    %233 = arith.divf %231, %232 : vector<64x1xf32>
    %234 = vector.broadcast %233 : vector<64x1xf32> to vector<64x16xf32>
    %235 = arith.subf %225, %234 : vector<64x16xf32>
    %236 = arith.mulf %235, %235 : vector<64x16xf32>
    %cst_116 = arith.constant dense<0.000000e+00> : vector<64xf32>
    %237 = vector.multi_reduction <add>, %236, %cst_116 [1] : vector<64x16xf32> to vector<64xf32>
    %238 = vector.shape_cast %237 : vector<64xf32> to vector<64x1xf32>
    %cst_117 = arith.constant 1.600000e+01 : f32
    %239 = vector.broadcast %cst_117 : f32 to vector<64x1xf32>
    %240 = arith.divf %238, %239 : vector<64x1xf32>
    %241 = vector.broadcast %233 : vector<64x1xf32> to vector<64x16xf32>
    %242 = arith.subf %225, %241 : vector<64x16xf32>
    %cst_118 = arith.constant 9.99999974E-6 : f32
    %243 = vector.broadcast %cst_118 : f32 to vector<64x1xf32>
    %244 = arith.addf %240, %243 : vector<64x1xf32>
    %245 = math.rsqrt %244 : vector<64x1xf32>
    %246 = vector.broadcast %245 : vector<64x1xf32> to vector<64x16xf32>
    %247 = arith.mulf %242, %246 : vector<64x16xf32>
    %248 = vector.broadcast %227 : vector<1x16xf32> to vector<64x16xf32>
    %249 = arith.mulf %247, %248 : vector<64x16xf32>
    %250 = vector.broadcast %229 : vector<1x16xf32> to vector<64x16xf32>
    %251 = arith.addf %249, %250 : vector<64x16xf32>
    %c0_119 = arith.constant 0 : index
    %c0_120 = arith.constant 0 : index
    %252 = vector.load %arg15[%c0_119, %c0_120] : memref<16x128xf32, #tpu.memory_space<vmem>>, vector<16x128xf32>
    %253 = arith.truncf %251 : vector<64x16xf32> to vector<64x16xbf16>
    %254 = arith.truncf %252 : vector<16x128xf32> to vector<16x128xbf16>
    %cst_121 = arith.constant dense<0.000000e+00> : vector<64x128xf32>
    %255 = tpu.matmul %253, %254, %cst_121 {dimension_numbers = #tpu.dot_dimension_numbers<[1], [0], [0], [1], [0, 0, 1, 1], [], []>} : vector<64x16xbf16>, vector<16x128xbf16>, vector<64x128xf32> -> vector<64x128xf32>
    %c0_122 = arith.constant 0 : index
    %c0_123 = arith.constant 0 : index
    %256 = vector.load %arg16[%c0_122, %c0_123] : memref<128x128xf32, #tpu.memory_space<vmem>>, vector<128x128xf32>
    %257 = arith.truncf %140 : vector<64x128xf32> to vector<64x128xbf16>
    %258 = arith.truncf %256 : vector<128x128xf32> to vector<128x128xbf16>
    %cst_124 = arith.constant dense<0.000000e+00> : vector<64x128xf32>
    %259 = tpu.matmul %257, %258, %cst_124 {dimension_numbers = #tpu.dot_dimension_numbers<[1], [0], [0], [1], [0, 0, 1, 1], [], []>} : vector<64x128xbf16>, vector<128x128xbf16>, vector<64x128xf32> -> vector<64x128xf32>
    %260 = arith.addf %255, %259 : vector<64x128xf32>
    %c0_125 = arith.constant 0 : index
    %c0_126 = arith.constant 0 : index
    %261 = vector.load %arg17[%c0_125, %c0_126] : memref<1x128xf32, #tpu.memory_space<vmem>>, vector<1x128xf32>
    %262 = vector.broadcast %261 : vector<1x128xf32> to vector<64x128xf32>
    %263 = arith.addf %260, %262 : vector<64x128xf32>
    %264 = arith.negf %263 : vector<64x128xf32>
    %265 = math.exp %264 : vector<64x128xf32>
    %cst_127 = arith.constant 1.000000e+00 : f32
    %266 = vector.broadcast %cst_127 : f32 to vector<64x128xf32>
    %267 = arith.addf %266, %265 : vector<64x128xf32>
    %268 = arith.divf %266, %267 : vector<64x128xf32>
    %c0_128 = arith.constant 0 : index
    %c0_129 = arith.constant 0 : index
    %269 = vector.load %arg18[%c0_128, %c0_129] : memref<64x128xf32, #tpu.memory_space<vmem>>, vector<64x128xf32>
    tpu.vector_store %arg18[%c0_128, %c0_129], %268 {strides = array<i32>} : memref<64x128xf32, #tpu.memory_space<vmem>>, vector<64x128xf32>,
    return
  }
}

</mosaic_0001>

<llo_original>
// kernel: tpu_custom_call.1
$region0: #{tpu_custom_call.1}
  #allocation0 [shape = 'u32[]', space=smem, size = 0x4, offset = 0x4, fixed_abs, tag = 'smem constant byte address 0x4 - core index']
  #allocation1 [shape = 'u32[144,128]{1,0:T(1,128)}', space=vmem, size = 0x12000, scoped, tag = 'internal scratch']
  %s0 = inlined_call_operand.vmem [shape: f32[64,16], index: 0, kind: input, shape index: {}]
  %s1 = inlined_call_operand.vmem [shape: f32[16,128], index: 1, kind: input, shape index: {}]
  %s2 = inlined_call_operand.vmem [shape: f32[1,128], index: 2, kind: input, shape index: {}]
  %s3 = inlined_call_operand.hbm [shape: f32[128,128], index: 3, kind: input, shape index: {}]
  %s4 = inlined_call_operand.hbm [shape: f32[1,128], index: 4, kind: input, shape index: {}]
  %s5 = inlined_call_operand.hbm [shape: f32[128,128], index: 5, kind: input, shape index: {}]
  %s6 = inlined_call_operand.hbm [shape: f32[1,128], index: 6, kind: input, shape index: {}]
  %s7 = inlined_call_operand.hbm [shape: f32[128,128], index: 7, kind: input, shape index: {}]
  %s8 = inlined_call_operand.hbm [shape: f32[1,128], index: 8, kind: input, shape index: {}]
  %s9 = inlined_call_operand.vmem [shape: f32[4,1,128], index: 9, kind: input, shape index: {}]
  %s10 = inlined_call_operand.vmem [shape: f32[4,1,128], index: 10, kind: input, shape index: {}]
  %s11 = inlined_call_operand.vmem [shape: f32[3,16,16], index: 11, kind: input, shape index: {}]
  %s12 = inlined_call_operand.vmem [shape: f32[3,1,16], index: 12, kind: input, shape index: {}]
  %s13 = inlined_call_operand.vmem [shape: f32[3,1,16], index: 13, kind: input, shape index: {}]
  %s14 = inlined_call_operand.vmem [shape: f32[3,1,16], index: 14, kind: input, shape index: {}]
  %s15 = inlined_call_operand.vmem [shape: f32[16,128], index: 15, kind: input, shape index: {}]
  %s16 = inlined_call_operand.hbm [shape: f32[128,128], index: 16, kind: input, shape index: {}]
  %s17 = inlined_call_operand.vmem [shape: f32[1,128], index: 17, kind: input, shape index: {}]
  %s18 = inlined_call_operand.hbm [shape: f32[64,128], index: 18, kind: output, shape index: {}]
  %s19 = sld [smem:[#allocation0]]
  $region110: #{tpu_custom_call.1} parent=0
    _
  %s21 = ssub.s32 1, %s19
  %s22 = scalar_select 0, %s21, %s19
  $region1: #{tpu_custom_call.1} parent=0
    #allocation2 [shape = 'u8[65536]{0}', space=vmem, size = 0x10000, scoped, tag = 'input window, operand 3, single buffered']
    #allocation3 [shape = 's32[1]{0}', space=sflag, size = 0x4, scoped, tag = 'scoped memory for tpu_custom_call.1']
    #allocation4 [shape = 's32[1]{0}', space=sflag, size = 0x4, scoped, tag = 'scoped memory for tpu_custom_call.1']
    #allocation5 [shape = 'u8[512]{0}', space=vmem, size = 0x400, scoped, tag = 'input window, operand 4, single buffered']
    #allocation6 [shape = 's32[1]{0}', space=sflag, size = 0x4, scoped, tag = 'scoped memory for tpu_custom_call.1']
    #allocation7 [shape = 'u8[65536]{0}', space=vmem, size = 0x10000, scoped, tag = 'input window, operand 5, single buffered']
    #allocation8 [shape = 'u8[512]{0}', space=vmem, size = 0x400, scoped, tag = 'input window, operand 6, single buffered']
    #allocation9 [shape = 's32[1]{0}', space=sflag, size = 0x4, scoped, tag = 'scoped memory for tpu_custom_call.1']
    #allocation10 [shape = 'u8[65536]{0}', space=vmem, size = 0x10000, scoped, tag = 'input window, operand 7, single buffered']
    #allocation11 [shape = 'u8[512]{0}', space=vmem, size = 0x400, scoped, tag = 'input window, operand 8, single buffered']
    #allocation12 [shape = 's32[1]{0}', space=sflag, size = 0x4, scoped, tag = 'scoped memory for tpu_custom_call.1']
    #allocation13 [shape = 'u8[65536]{0}', space=vmem, size = 0x10000, scoped, tag = 'input window, operand 16, single buffered']
    #allocation14 [shape = 'u8[32768]{0}', space=vmem, size = 0x8000, scoped, tag = 'output window, operand 0, single buffered']
    %23 = vsyncpa [#allocation3], 0
    %24 = vsyncpa [#allocation6], 0
    %25 = vsyncpa [#allocation9], 0
    %26 = vsyncpa [#allocation12], 0
    %27 = vsyncpa [#allocation4], 0
    // Predicated region
    $region2: #{tpu_custom_call.1} parent=1 // pred_check
      _
    $region3: #{tpu_custom_call.1} parent=1 // pred_check_branch
      %29 = sbr.rel (0) target = $region5
    $region4: #{tpu_custom_call.1} parent=1 // pred_region
      _
    $region5: #{tpu_custom_call.1} parent=1 // pred_fallthru
      _
    // Predicated region
    $region6: #{tpu_custom_call.1} parent=1 // pred_check
      _
    $region7: #{tpu_custom_call.1} parent=1 // pred_check_branch
      %31 = sbr.rel (0) target = $region9
    $region8: #{tpu_custom_call.1} parent=1 // pred_region
      _
    $region9: #{tpu_custom_call.1} parent=1 // pred_fallthru
      _
    // Predicated region
    $region10: #{tpu_custom_call.1} parent=1 // pred_check
      _
    $region11: #{tpu_custom_call.1} parent=1 // pred_check_branch
      %33 = sbr.rel (0) target = $region13
    $region12: #{tpu_custom_call.1} parent=1 // pred_region
      _
    $region13: #{tpu_custom_call.1} parent=1 // pred_fallthru
      _
    // Predicated region
    $region14: #{tpu_custom_call.1} parent=1 // pred_check
      _
    $region15: #{tpu_custom_call.1} parent=1 // pred_check_branch
      %35 = sbr.rel (0) target = $region17
    $region16: #{tpu_custom_call.1} parent=1 // pred_region
      %s37 = ssub.s32 2048, 2048
      %38 = vsyncadd [#allocation3], %s37
      %s39 = sshll.u32 [#allocation2], 4
      %s40 = int_to_ptr.vmem [resolvable:$true] %s39
      %45 = dma.hbm_to_vmem [thread:$0]  %s3, 2048, %s40, [#allocation3], 128, 128, 8
    $region17: #{tpu_custom_call.1} parent=1 // pred_fallthru
      _
    // Predicated region
    $region18: #{tpu_custom_call.1} parent=1 // pred_check
      _
    $region19: #{tpu_custom_call.1} parent=1 // pred_check_branch
      %47 = sbr.rel (0) target = $region21
    $region20: #{tpu_custom_call.1} parent=1 // pred_region
      %s49 = ssub.s32 16, 16
      %50 = vsyncadd [#allocation6], %s49
      %s52 = sshll.u32 [#allocation5], 4
      %s53 = int_to_ptr.vmem [resolvable:$true] %s52
      %55 = dma.hbm_to_vmem [thread:$0]  %s4, 16, %s53, [#allocation6]
    $region21: #{tpu_custom_call.1} parent=1 // pred_fallthru
      _
    // Predicated region
    $region22: #{tpu_custom_call.1} parent=1 // pred_check
      _
    $region23: #{tpu_custom_call.1} parent=1 // pred_check_branch
      %57 = sbr.rel (0) target = $region25
    $region24: #{tpu_custom_call.1} parent=1 // pred_region
      %s59 = ssub.s32 2048, 2048
      %60 = vsyncadd [#allocation6], %s59
      %s61 = sshll.u32 [#allocation7], 4
      %s62 = int_to_ptr.vmem [resolvable:$true] %s61
      %67 = dma.hbm_to_vmem [thread:$0]  %s5, 2048, %s62, [#allocation6], 128, 128, 8
    $region25: #{tpu_custom_call.1} parent=1 // pred_fallthru
      _
    // Predicated region
    $region26: #{tpu_custom_call.1} parent=1 // pred_check
      _
    $region27: #{tpu_custom_call.1} parent=1 // pred_check_branch
      %69 = sbr.rel (0) target = $region29
    $region28: #{tpu_custom_call.1} parent=1 // pred_region
      %s71 = ssub.s32 16, 16
      %72 = vsyncadd [#allocation9], %s71
      %s74 = sshll.u32 [#allocation8], 4
      %s75 = int_to_ptr.vmem [resolvable:$true] %s74
      %77 = dma.hbm_to_vmem [thread:$0]  %s6, 16, %s75, [#allocation9]
    $region29: #{tpu_custom_call.1} parent=1 // pred_fallthru
      _
    // Predicated region
    $region30: #{tpu_custom_call.1} parent=1 // pred_check
      _
    $region31: #{tpu_custom_call.1} parent=1 // pred_check_branch
      %79 = sbr.rel (0) target = $region33
    $region32: #{tpu_custom_call.1} parent=1 // pred_region
      %s81 = ssub.s32 2048, 2048
      %82 = vsyncadd [#allocation9], %s81
      %s83 = sshll.u32 [#allocation10], 4
      %s84 = int_to_ptr.vmem [resolvable:$true] %s83
      %89 = dma.hbm_to_vmem [thread:$0]  %s7, 2048, %s84, [#allocation9], 128, 128, 8
    $region33: #{tpu_custom_call.1} parent=1 // pred_fallthru
      _
    // Predicated region
    $region34: #{tpu_custom_call.1} parent=1 // pred_check
      _
    $region35: #{tpu_custom_call.1} parent=1 // pred_check_branch
      %91 = sbr.rel (0) target = $region37
    $region36: #{tpu_custom_call.1} parent=1 // pred_region
      %s93 = ssub.s32 16, 16
      %94 = vsyncadd [#allocation12], %s93
      %s96 = sshll.u32 [#allocation11], 4
      %s97 = int_to_ptr.vmem [resolvable:$true] %s96
      %99 = dma.hbm_to_vmem [thread:$0]  %s8, 16, %s97, [#allocation12]
    $region37: #{tpu_custom_call.1} parent=1 // pred_fallthru
      _
    // Predicated region
    $region38: #{tpu_custom_call.1} parent=1 // pred_check
      _
    $region39: #{tpu_custom_call.1} parent=1 // pred_check_branch
      %101 = sbr.rel (0) target = $region41
    $region40: #{tpu_custom_call.1} parent=1 // pred_region
      _
    $region41: #{tpu_custom_call.1} parent=1 // pred_fallthru
      _
    // Predicated region
    $region42: #{tpu_custom_call.1} parent=1 // pred_check
      _
    $region43: #{tpu_custom_call.1} parent=1 // pred_check_branch
      %103 = sbr.rel (0) target = $region45
    $region44: #{tpu_custom_call.1} parent=1 // pred_region
      _
    $region45: #{tpu_custom_call.1} parent=1 // pred_fallthru
      _
    // Predicated region
    $region46: #{tpu_custom_call.1} parent=1 // pred_check
      _
    $region47: #{tpu_custom_call.1} parent=1 // pred_check_branch
      %105 = sbr.rel (0) target = $region49
    $region48: #{tpu_custom_call.1} parent=1 // pred_region
      _
    $region49: #{tpu_custom_call.1} parent=1 // pred_fallthru
      _
    // Predicated region
    $region50: #{tpu_custom_call.1} parent=1 // pred_check
      _
    $region51: #{tpu_custom_call.1} parent=1 // pred_check_branch
      %107 = sbr.rel (0) target = $region53
    $region52: #{tpu_custom_call.1} parent=1 // pred_region
      _
    $region53: #{tpu_custom_call.1} parent=1 // pred_fallthru
      _
    // Predicated region
    $region54: #{tpu_custom_call.1} parent=1 // pred_check
      _
    $region55: #{tpu_custom_call.1} parent=1 // pred_check_branch
      %109 = sbr.rel (0) target = $region57
    $region56: #{tpu_custom_call.1} parent=1 // pred_region
      _
    $region57: #{tpu_custom_call.1} parent=1 // pred_fallthru
      _
    // Predicated region
    $region58: #{tpu_custom_call.1} parent=1 // pred_check
      _
    $region59: #{tpu_custom_call.1} parent=1 // pred_check_branch
      %111 = sbr.rel (0) target = $region61
    $region60: #{tpu_custom_call.1} parent=1 // pred_region
      _
    $region61: #{tpu_custom_call.1} parent=1 // pred_fallthru
      _
    // Predicated region
    $region62: #{tpu_custom_call.1} parent=1 // pred_check
      _
    $region63: #{tpu_custom_call.1} parent=1 // pred_check_branch
      %113 = sbr.rel (0) target = $region65
    $region64: #{tpu_custom_call.1} parent=1 // pred_region
      _
    $region65: #{tpu_custom_call.1} parent=1 // pred_fallthru
      _
    // Predicated region
    $region66: #{tpu_custom_call.1} parent=1 // pred_check
      _
    $region67: #{tpu_custom_call.1} parent=1 // pred_check_branch
      %115 = sbr.rel (0) target = $region69
    $region68: #{tpu_custom_call.1} parent=1 // pred_region
      %s117 = ssub.s32 2048, 2048
      %118 = vsyncadd [#allocation12], %s117
      %s119 = sshll.u32 [#allocation13], 4
      %s120 = int_to_ptr.vmem [resolvable:$true] %s119
      %125 = dma.hbm_to_vmem [thread:$0]  %s16, 2048, %s120, [#allocation12], 128, 128, 8
    $region69: #{tpu_custom_call.1} parent=1 // pred_fallthru
      _
    // Predicated region
    $region70: #{tpu_custom_call.1} parent=1 // pred_check
      _
    $region71: #{tpu_custom_call.1} parent=1 // pred_check_branch
      %127 = sbr.rel (0) target = $region73
    $region72: #{tpu_custom_call.1} parent=1 // pred_region
      _
    $region73: #{tpu_custom_call.1} parent=1 // pred_fallthru
      _
    // Predicated region
    $region74: #{tpu_custom_call.1} parent=1 // pred_check
      _
    $region75: #{tpu_custom_call.1} parent=1 // pred_check_branch
      %129 = sbr.rel (0) target = $region77
    $region76: #{tpu_custom_call.1} parent=1 // pred_region
      %130 = dma.done [#allocation3], 2048
    $region77: #{tpu_custom_call.1} parent=1 // pred_fallthru
      _
    // Predicated region
    $region78: #{tpu_custom_call.1} parent=1 // pred_check
      _
    $region79: #{tpu_custom_call.1} parent=1 // pred_check_branch
      %132 = sbr.rel (0) target = $region81
    $region80: #{tpu_custom_call.1} parent=1 // pred_region
      %133 = dma.done [#allocation6], 16
    $region81: #{tpu_custom_call.1} parent=1 // pred_fallthru
      _
    // Predicated region
    $region82: #{tpu_custom_call.1} parent=1 // pred_check
      _
    $region83: #{tpu_custom_call.1} parent=1 // pred_check_branch
      %135 = sbr.rel (0) target = $region85
    $region84: #{tpu_custom_call.1} parent=1 // pred_region
      %136 = dma.done [#allocation6], 2048
    $region85: #{tpu_custom_call.1} parent=1 // pred_fallthru
      _
    // Predicated region
    $region86: #{tpu_custom_call.1} parent=1 // pred_check
      _
    $region87: #{tpu_custom_call.1} parent=1 // pred_check_branch
      %138 = sbr.rel (0) target = $region89
    $region88: #{tpu_custom_call.1} parent=1 // pred_region
      %139 = dma.done [#allocation9], 16
    $region89: #{tpu_custom_call.1} parent=1 // pred_fallthru
      _
    // Predicated region
    $region90: #{tpu_custom_call.1} parent=1 // pred_check
      _
    $region91: #{tpu_custom_call.1} parent=1 // pred_check_branch
      %141 = sbr.rel (0) target = $region93
    $region92: #{tpu_custom_call.1} parent=1 // pred_region
      %142 = dma.done [#allocation9], 2048
    $region93: #{tpu_custom_call.1} parent=1 // pred_fallthru
      _
    // Predicated region
    $region94: #{tpu_custom_call.1} parent=1 // pred_check
      _
    $region95: #{tpu_custom_call.1} parent=1 // pred_check_branch
      %144 = sbr.rel (0) target = $region97
    $region96: #{tpu_custom_call.1} parent=1 // pred_region
      %145 = dma.done [#allocation12], 16
    $region97: #{tpu_custom_call.1} parent=1 // pred_fallthru
      _
    // Predicated region
    $region98: #{tpu_custom_call.1} parent=1 // pred_check
      _
    $region99: #{tpu_custom_call.1} parent=1 // pred_check_branch
      %147 = sbr.rel (0) target = $region101
    $region100: #{tpu_custom_call.1} parent=1 // pred_region
      %148 = dma.done [#allocation12], 2048
    $region101: #{tpu_custom_call.1} parent=1 // pred_fallthru
      _
    %v150 = vld [vmem:[%s0] sm:$0xff]
    %v151 = vld [vmem:[%s0 + $0x8] sm:$0xff]
    %v152 = vld [vmem:[%s0 + $0x10] sm:$0xff]
    %v153 = vld [vmem:[%s0 + $0x18] sm:$0xff]
    %v154 = vld [vmem:[%s0 + $0x20] sm:$0xff]
    %v155 = vld [vmem:[%s0 + $0x28] sm:$0xff]
    %v156 = vld [vmem:[%s0 + $0x30] sm:$0xff]
    %v157 = vld [vmem:[%s0 + $0x38] sm:$0xff]
    %v158 = vld [vmem:[%s1] sm:$0xff]
    %v159 = vld [vmem:[%s1 + $0x8] sm:$0xff]
    %v160 = vpack.c.bf16 %v151, %v150
    %v161 = vpack.c.bf16 %v153, %v152
    %v162 = vpack.c.bf16 %v155, %v154
    %v163 = vpack.c.bf16 %v157, %v156
    %v164 = vpack.c.bf16 %v159, %v158
    %v165 = vld [vmem:[%s2] sm:$0x1]
    %v167 = vlaneseq
    %v168 = vshrl.u32 %v167, 7
    %v169 = vsub.s32 0, %v168
    %v170 = vrot.slane %v165, %v169
    %vm172 = vcmask 130048
    %v174 = vsel %vm172, %v160, 0
    %v177 = vsel %vm172, %v161, 0
    %v180 = vsel %vm172, %v162, 0
    %v183 = vsel %vm172, %v163, 0
    %185 = vmatprep.subr.bf16.mxu0 0
    %186 = vmatpush1.bf16.msra.mxu0 0
    %187 = vmatprep.subr.bf16.mxu0 0
    %188 = vmatpush1.bf16.msra.mxu0 0
    %189 = vmatprep.subr.bf16.mxu0 0
    %190 = vmatpush1.bf16.msra.mxu0 0
    %191 = vmatprep.subr.bf16.mxu0 0
    %192 = vmatpush1.bf16.msra.mxu0 0
    %193 = vmatprep.subr.bf16.mxu0 0
    %194 = vmatpush1.bf16.msra.mxu0 0
    %195 = vmatprep.subr.bf16.mxu0 0
    %196 = vmatpush1.bf16.msra.mxu0 0
    %197 = vmatprep.subr.bf16.mxu0 0
    %198 = vmatpush1.bf16.msra.mxu0 0
    %199 = vmatprep.subr.bf16.mxu0 0
    %200 = vmatpush1.bf16.msra.mxu0 %v164
    %201 = vmatprep.subr.bf16.mxu0 0
    %202 = vmatpush2.bf16.msra.mxu0 0
    %203 = vmatprep.subr.bf16.mxu0 0
    %204 = vmatpush2.bf16.msra.mxu0 0
    %205 = vmatprep.subr.bf16.mxu0 0
    %206 = vmatpush2.bf16.msra.mxu0 0
    %207 = vmatprep.subr.bf16.mxu0 0
    %208 = vmatpush2.bf16.msra.mxu0 0
    %209 = vmatprep.subr.bf16.mxu0 0
    %210 = vmatpush2.bf16.msra.mxu0 0
    %211 = vmatprep.subr.bf16.mxu0 0
    %212 = vmatpush2.bf16.msra.mxu0 0
    %213 = vmatprep.subr.bf16.mxu0 0
    %214 = vmatpush2.bf16.msra.mxu0 0
    %215 = vmatprep.subr.bf16.mxu0 0
    %216 = vmatpush2.bf16.msra.mxu0 0
    %217 = vmatprep.mubr.bf16.mxu0 0
    %218 = vmatmul.mubr.bf16.gmra.mxu0 %v174
    %v219 = vpop.f32.mrf.mxu0
    %v220 = vadd.f32 %v170, %v219
    %v221 = vpop.f32.mrf.mxu0
    %v222 = vpop.f32.mrf.mxu0
    %v223 = vadd.f32 %v170, %v222
    %v224 = vpop.f32.mrf.mxu0
    %225 = vmatprep.mubr.bf16.mxu0 0
    %226 = vmatmul.mubr.bf16.gmra.mxu0 %v177
    %v227 = vpop.f32.mrf.mxu0
    %v228 = vadd.f32 %v170, %v227
    %v229 = vpop.f32.mrf.mxu0
    %v230 = vpop.f32.mrf.mxu0
    %v231 = vadd.f32 %v170, %v230
    %v232 = vpop.f32.mrf.mxu0
    %233 = vmatprep.mubr.bf16.mxu0 0
    %234 = vmatmul.mubr.bf16.gmra.mxu0 %v180
    %v235 = vpop.f32.mrf.mxu0
    %v236 = vadd.f32 %v170, %v235
    %v237 = vpop.f32.mrf.mxu0
    %v238 = vpop.f32.mrf.mxu0
    %v239 = vadd.f32 %v170, %v238
    %v240 = vpop.f32.mrf.mxu0
    %241 = vmatprep.mubr.bf16.mxu0 0
    %242 = vmatmul.mubr.bf16.gmra.mxu0 %v183
    %v243 = vpop.f32.mrf.mxu0
    %v244 = vadd.f32 %v170, %v243
    %v245 = vpop.f32.mrf.mxu0
    %v246 = vpop.f32.mrf.mxu0
    %v247 = vadd.f32 %v170, %v246
    %v248 = vpop.f32.mrf.mxu0
    %249 = vdwg.mxu0
    %v250 = vld [vmem:[%s9] sm:$0x1]
    %v251 = vld [vmem:[%s10] sm:$0x1]
    %v252 = vadd.f32 %v220, %v223
    %v253 = vadd.f32 %v252, %v228
    %v254 = vadd.f32 %v253, %v231
    %v255 = vadd.f32 %v254, %v236
    %v256 = vadd.f32 %v255, %v239
    %v257 = vadd.f32 %v256, %v244
    %v258 = vadd.f32 %v257, %v247
    %v259 = vrot.slane %v258, 4
    %v260 = vadd.f32 %v258, %v259
    %v261 = vrot.slane %v260, 2
    %v262 = vadd.f32 %v260, %v261
    %v263 = vrot.slane %v262, 1
    %v264 = vadd.f32 %v262, %v263
    %v265 = vrcp.pop 64.0
    %v266 = vmul.f32 %v264, %v265
    %v267 = vsub.f32 %v220, %v266
    %v268 = vsub.f32 %v223, %v266
    %v269 = vsub.f32 %v228, %v266
    %v270 = vsub.f32 %v231, %v266
    %v271 = vsub.f32 %v236, %v266
    %v272 = vsub.f32 %v239, %v266
    %v273 = vsub.f32 %v244, %v266
    %v274 = vsub.f32 %v247, %v266
    %v275 = vmul.f32 %v267, %v267
    %v276 = vmul.f32 %v268, %v268
    %v277 = vmul.f32 %v269, %v269
    %v278 = vmul.f32 %v270, %v270
    %v279 = vmul.f32 %v271, %v271
    %v280 = vmul.f32 %v272, %v272
    %v281 = vmul.f32 %v273, %v273
    %v282 = vmul.f32 %v274, %v274
    %v283 = vadd.f32 %v275, %v276
    %v284 = vadd.f32 %v283, %v277
    %v285 = vadd.f32 %v284, %v278
    %v286 = vadd.f32 %v285, %v279
    %v287 = vadd.f32 %v286, %v280
    %v288 = vadd.f32 %v287, %v281
    %v289 = vadd.f32 %v288, %v282
    %v290 = vrot.slane %v289, 4
    %v291 = vadd.f32 %v289, %v290
    %v292 = vrot.slane %v291, 2
    %v293 = vadd.f32 %v291, %v292
    %v294 = vrot.slane %v293, 1
    %v295 = vadd.f32 %v293, %v294
    %v296 = vmul.f32 %v295, %v265
    %v297 = vadd.f32 %v296, 1e-05
    %v298 = vrsqrt.pop %v297
    %v299 = vmul.f32 %v267, %v298
    %v300 = vmul.f32 %v268, %v298
    %v301 = vmul.f32 %v269, %v298
    %v302 = vmul.f32 %v270, %v298
    %v303 = vmul.f32 %v271, %v298
    %v304 = vmul.f32 %v272, %v298
    %v305 = vmul.f32 %v273, %v298
    %v306 = vmul.f32 %v274, %v298
    %v308 = vlaneseq
    %v309 = vshrl.u32 %v308, 7
    %v310 = vsub.s32 0, %v309
    %v311 = vrot.slane %v250, %v310
    %v313 = vmul.f32 %v299, %v311
    %v314 = vmul.f32 %v300, %v311
    %v315 = vmul.f32 %v301, %v311
    %v316 = vmul.f32 %v302, %v311
    %v317 = vmul.f32 %v303, %v311
    %v318 = vmul.f32 %v304, %v311
    %v319 = vmul.f32 %v305, %v311
    %v320 = vmul.f32 %v306, %v311
    %v322 = vlaneseq
    %v323 = vshrl.u32 %v322, 7
    %v324 = vsub.s32 0, %v323
    %v325 = vrot.slane %v251, %v324
    %v327 = vadd.f32 %v313, %v325
    %v328 = vadd.f32 %v314, %v325
    %v329 = vadd.f32 %v315, %v325
    %v330 = vadd.f32 %v316, %v325
    %v331 = vadd.f32 %v317, %v325
    %v332 = vadd.f32 %v318, %v325
    %v333 = vadd.f32 %v319, %v325
    %v334 = vadd.f32 %v320, %v325
    %v335 = vmax.f32 %v327, 0.0
    %v336 = vmax.f32 %v328, 0.0
    %v337 = vmax.f32 %v329, 0.0
    %v338 = vmax.f32 %v330, 0.0
    %v339 = vmax.f32 %v331, 0.0
    %v340 = vmax.f32 %v332, 0.0
    %v341 = vmax.f32 %v333, 0.0
    %v342 = vmax.f32 %v334, 0.0
    %v343 = vld [vmem:[#allocation2] sm:$0xff]
    %v344 = vld [vmem:[#allocation2 + $0x8] sm:$0xff]
    %v345 = vld [vmem:[#allocation2 + $0x10] sm:$0xff]
    %v346 = vld [vmem:[#allocation2 + $0x18] sm:$0xff]
    %v347 = vld [vmem:[#allocation2 + $0x20] sm:$0xff]
    %v348 = vld [vmem:[#allocation2 + $0x28] sm:$0xff]
    %v349 = vld [vmem:[#allocation2 + $0x30] sm:$0xff]
    %v350 = vld [vmem:[#allocation2 + $0x38] sm:$0xff]
    %v351 = vld [vmem:[#allocation2 + $0x40] sm:$0xff]
    %v352 = vld [vmem:[#allocation2 + $0x48] sm:$0xff]
    %v353 = vld [vmem:[#allocation2 + $0x50] sm:$0xff]
    %v354 = vld [vmem:[#allocation2 + $0x58] sm:$0xff]
    %v355 = vld [vmem:[#allocation2 + $0x60] sm:$0xff]
    %v356 = vld [vmem:[#allocation2 + $0x68] sm:$0xff]
    %v357 = vld [vmem:[#allocation2 + $0x70] sm:$0xff]
    %v358 = vld [vmem:[#allocation2 + $0x78] sm:$0xff]
    %v359 = vpack.c.bf16 %v336, %v335
    %v360 = vpack.c.bf16 %v338, %v337
    %v361 = vpack.c.bf16 %v340, %v339
    %v362 = vpack.c.bf16 %v342, %v341
    %v363 = vpack.c.bf16 %v344, %v343
    %v364 = vpack.c.bf16 %v346, %v345
    %v365 = vpack.c.bf16 %v348, %v347
    %v366 = vpack.c.bf16 %v350, %v349
    %v367 = vpack.c.bf16 %v352, %v351
    %v368 = vpack.c.bf16 %v354, %v353
    %v369 = vpack.c.bf16 %v356, %v355
    %v370 = vpack.c.bf16 %v358, %v357
    %v371 = vld [vmem:[#allocation5] sm:$0x1]
    %v373 = vlaneseq
    %v374 = vshrl.u32 %v373, 7
    %v375 = vsub.s32 0, %v374
    %v376 = vrot.slane %v371, %v375
    %378 = vmatprep.subr.bf16.mxu0 0
    %379 = vmatpush1.bf16.msra.mxu0 %v370
    %380 = vmatprep.subr.bf16.mxu0 0
    %381 = vmatpush1.bf16.msra.mxu0 %v369
    %382 = vmatprep.subr.bf16.mxu0 0
    %383 = vmatpush1.bf16.msra.mxu0 %v368
    %384 = vmatprep.subr.bf16.mxu0 0
    %385 = vmatpush1.bf16.msra.mxu0 %v367
    %386 = vmatprep.subr.bf16.mxu0 0
    %387 = vmatpush1.bf16.msra.mxu0 %v366
    %388 = vmatprep.subr.bf16.mxu0 0
    %389 = vmatpush1.bf16.msra.mxu0 %v365
    %390 = vmatprep.subr.bf16.mxu0 0
    %391 = vmatpush1.bf16.msra.mxu0 %v364
    %392 = vmatprep.subr.bf16.mxu0 0
    %393 = vmatpush1.bf16.msra.mxu0 %v363
    %394 = vmatprep.subr.bf16.mxu0 0
    %395 = vmatpush2.bf16.msra.mxu0 0
    %396 = vmatprep.subr.bf16.mxu0 0
    %397 = vmatpush2.bf16.msra.mxu0 0
    %398 = vmatprep.subr.bf16.mxu0 0
    %399 = vmatpush2.bf16.msra.mxu0 0
    %400 = vmatprep.subr.bf16.mxu0 0
    %401 = vmatpush2.bf16.msra.mxu0 0
    %402 = vmatprep.subr.bf16.mxu0 0
    %403 = vmatpush2.bf16.msra.mxu0 0
    %404 = vmatprep.subr.bf16.mxu0 0
    %405 = vmatpush2.bf16.msra.mxu0 0
    %406 = vmatprep.subr.bf16.mxu0 0
    %407 = vmatpush2.bf16.msra.mxu0 0
    %408 = vmatprep.subr.bf16.mxu0 0
    %409 = vmatpush2.bf16.msra.mxu0 0
    %410 = vmatprep.mubr.bf16.mxu0 0
    %411 = vmatmul.mubr.bf16.gmra.mxu0 %v359
    %v412 = vpop.f32.mrf.mxu0
    %v413 = vadd.f32 %v376, %v412
    %v414 = vpop.f32.mrf.mxu0
    %v415 = vpop.f32.mrf.mxu0
    %v416 = vadd.f32 %v376, %v415
    %v417 = vpop.f32.mrf.mxu0
    %418 = vmatprep.mubr.bf16.mxu0 0
    %419 = vmatmul.mubr.bf16.gmra.mxu0 %v360
    %v420 = vpop.f32.mrf.mxu0
    %v421 = vadd.f32 %v376, %v420
    %v422 = vpop.f32.mrf.mxu0
    %v423 = vpop.f32.mrf.mxu0
    %v424 = vadd.f32 %v376, %v423
    %v425 = vpop.f32.mrf.mxu0
    %426 = vmatprep.mubr.bf16.mxu0 0
    %427 = vmatmul.mubr.bf16.gmra.mxu0 %v361
    %v428 = vpop.f32.mrf.mxu0
    %v429 = vadd.f32 %v376, %v428
    %v430 = vpop.f32.mrf.mxu0
    %v431 = vpop.f32.mrf.mxu0
    %v432 = vadd.f32 %v376, %v431
    %v433 = vpop.f32.mrf.mxu0
    %434 = vmatprep.mubr.bf16.mxu0 0
    %435 = vmatmul.mubr.bf16.gmra.mxu0 %v362
    %v436 = vpop.f32.mrf.mxu0
    %v437 = vadd.f32 %v376, %v436
    %v438 = vpop.f32.mrf.mxu0
    %v439 = vpop.f32.mrf.mxu0
    %v440 = vadd.f32 %v376, %v439
    %v441 = vpop.f32.mrf.mxu0
    %442 = vdwg.mxu0
    %s443 = scalar_lea.vmem %s9, 1
    %v444 = vld [vmem:[%s443] sm:$0x1]
    %s445 = scalar_lea.vmem %s10, 1
    %v446 = vld [vmem:[%s445] sm:$0x1]
    %v447 = vadd.f32 %v413, %v416
    %v448 = vadd.f32 %v447, %v421
    %v449 = vadd.f32 %v448, %v424
    %v450 = vadd.f32 %v449, %v429
    %v451 = vadd.f32 %v450, %v432
    %v452 = vadd.f32 %v451, %v437
    %v453 = vadd.f32 %v452, %v440
    %v454 = vrot.slane %v453, 4
    %v455 = vadd.f32 %v453, %v454
    %v456 = vrot.slane %v455, 2
    %v457 = vadd.f32 %v455, %v456
    %v458 = vrot.slane %v457, 1
    %v459 = vadd.f32 %v457, %v458
    %v460 = vmul.f32 %v459, %v265
    %v461 = vsub.f32 %v413, %v460
    %v462 = vsub.f32 %v416, %v460
    %v463 = vsub.f32 %v421, %v460
    %v464 = vsub.f32 %v424, %v460
    %v465 = vsub.f32 %v429, %v460
    %v466 = vsub.f32 %v432, %v460
    %v467 = vsub.f32 %v437, %v460
    %v468 = vsub.f32 %v440, %v460
    %v469 = vmul.f32 %v461, %v461
    %v470 = vmul.f32 %v462, %v462
    %v471 = vmul.f32 %v463, %v463
    %v472 = vmul.f32 %v464, %v464
    %v473 = vmul.f32 %v465, %v465
    %v474 = vmul.f32 %v466, %v466
    %v475 = vmul.f32 %v467, %v467
    %v476 = vmul.f32 %v468, %v468
    %v477 = vadd.f32 %v469, %v470
    %v478 = vadd.f32 %v477, %v471
    %v479 = vadd.f32 %v478, %v472
    %v480 = vadd.f32 %v479, %v473
    %v481 = vadd.f32 %v480, %v474
    %v482 = vadd.f32 %v481, %v475
    %v483 = vadd.f32 %v482, %v476
    %v484 = vrot.slane %v483, 4
    %v485 = vadd.f32 %v483, %v484
    %v486 = vrot.slane %v485, 2
    %v487 = vadd.f32 %v485, %v486
    %v488 = vrot.slane %v487, 1
    %v489 = vadd.f32 %v487, %v488
    %v490 = vmul.f32 %v489, %v265
    %v491 = vadd.f32 %v490, 1e-05
    %v492 = vrsqrt.pop %v491
    %v493 = vmul.f32 %v461, %v492
    %v494 = vmul.f32 %v462, %v492
    %v495 = vmul.f32 %v463, %v492
    %v496 = vmul.f32 %v464, %v492
    %v497 = vmul.f32 %v465, %v492
    %v498 = vmul.f32 %v466, %v492
    %v499 = vmul.f32 %v467, %v492
    %v500 = vmul.f32 %v468, %v492
    %v502 = vlaneseq
    %v503 = vshrl.u32 %v502, 7
    %v504 = vsub.s32 0, %v503
    %v505 = vrot.slane %v444, %v504
    %v507 = vmul.f32 %v493, %v505
    %v508 = vmul.f32 %v494, %v505
    %v509 = vmul.f32 %v495, %v505
    %v510 = vmul.f32 %v496, %v505
    %v511 = vmul.f32 %v497, %v505
    %v512 = vmul.f32 %v498, %v505
    %v513 = vmul.f32 %v499, %v505
    %v514 = vmul.f32 %v500, %v505
    %v516 = vlaneseq
    %v517 = vshrl.u32 %v516, 7
    %v518 = vsub.s32 0, %v517
    %v519 = vrot.slane %v446, %v518
    %v521 = vadd.f32 %v507, %v519
    %v522 = vadd.f32 %v508, %v519
    %v523 = vadd.f32 %v509, %v519
    %v524 = vadd.f32 %v510, %v519
    %v525 = vadd.f32 %v511, %v519
    %v526 = vadd.f32 %v512, %v519
    %v527 = vadd.f32 %v513, %v519
    %v528 = vadd.f32 %v514, %v519
    %v529 = vmax.f32 %v521, 0.0
    %v530 = vmax.f32 %v522, 0.0
    %v531 = vmax.f32 %v523, 0.0
    %v532 = vmax.f32 %v524, 0.0
    %v533 = vmax.f32 %v525, 0.0
    %v534 = vmax.f32 %v526, 0.0
    %v535 = vmax.f32 %v527, 0.0
    %v536 = vmax.f32 %v528, 0.0
    %v537 = vld [vmem:[#allocation7] sm:$0xff]
    %v538 = vld [vmem:[#allocation7 + $0x8] sm:$0xff]
    %v539 = vld [vmem:[#allocation7 + $0x10] sm:$0xff]
    %v540 = vld [vmem:[#allocation7 + $0x18] sm:$0xff]
    %v541 = vld [vmem:[#allocation7 + $0x20] sm:$0xff]
    %v542 = vld [vmem:[#allocation7 + $0x28] sm:$0xff]
    %v543 = vld [vmem:[#allocation7 + $0x30] sm:$0xff]
    %v544 = vld [vmem:[#allocation7 + $0x38] sm:$0xff]
    %v545 = vld [vmem:[#allocation7 + $0x40] sm:$0xff]
    %v546 = vld [vmem:[#allocation7 + $0x48] sm:$0xff]
    %v547 = vld [vmem:[#allocation7 + $0x50] sm:$0xff]
    %v548 = vld [vmem:[#allocation7 + $0x58] sm:$0xff]
    %v549 = vld [vmem:[#allocation7 + $0x60] sm:$0xff]
    %v550 = vld [vmem:[#allocation7 + $0x68] sm:$0xff]
    %v551 = vld [vmem:[#allocation7 + $0x70] sm:$0xff]
    %v552 = vld [vmem:[#allocation7 + $0x78] sm:$0xff]
    %v553 = vpack.c.bf16 %v530, %v529
    %v554 = vpack.c.bf16 %v532, %v531
    %v555 = vpack.c.bf16 %v534, %v533
    %v556 = vpack.c.bf16 %v536, %v535
    %v557 = vpack.c.bf16 %v538, %v537
    %v558 = vpack.c.bf16 %v540, %v539
    %v559 = vpack.c.bf16 %v542, %v541
    %v560 = vpack.c.bf16 %v544, %v543
    %v561 = vpack.c.bf16 %v546, %v545
    %v562 = vpack.c.bf16 %v548, %v547
    %v563 = vpack.c.bf16 %v550, %v549
    %v564 = vpack.c.bf16 %v552, %v551
    %v565 = vld [vmem:[#allocation8] sm:$0x1]
    %v567 = vlaneseq
    %v568 = vshrl.u32 %v567, 7
    %v569 = vsub.s32 0, %v568
    %v570 = vrot.slane %v565, %v569
    %572 = vmatprep.subr.bf16.mxu0 0
    %573 = vmatpush1.bf16.msra.mxu0 %v564
    %574 = vmatprep.subr.bf16.mxu0 0
    %575 = vmatpush1.bf16.msra.mxu0 %v563
    %576 = vmatprep.subr.bf16.mxu0 0
    %577 = vmatpush1.bf16.msra.mxu0 %v562
    %578 = vmatprep.subr.bf16.mxu0 0
    %579 = vmatpush1.bf16.msra.mxu0 %v561
    %580 = vmatprep.subr.bf16.mxu0 0
    %581 = vmatpush1.bf16.msra.mxu0 %v560
    %582 = vmatprep.subr.bf16.mxu0 0
    %583 = vmatpush1.bf16.msra.mxu0 %v559
    %584 = vmatprep.subr.bf16.mxu0 0
    %585 = vmatpush1.bf16.msra.mxu0 %v558
    %586 = vmatprep.subr.bf16.mxu0 0
    %587 = vmatpush1.bf16.msra.mxu0 %v557
    %588 = vmatprep.subr.bf16.mxu0 0
    %589 = vmatpush2.bf16.msra.mxu0 0
    %590 = vmatprep.subr.bf16.mxu0 0
    %591 = vmatpush2.bf16.msra.mxu0 0
    %592 = vmatprep.subr.bf16.mxu0 0
    %593 = vmatpush2.bf16.msra.mxu0 0
    %594 = vmatprep.subr.bf16.mxu0 0
    %595 = vmatpush2.bf16.msra.mxu0 0
    %596 = vmatprep.subr.bf16.mxu0 0
    %597 = vmatpush2.bf16.msra.mxu0 0
    %598 = vmatprep.subr.bf16.mxu0 0
    %599 = vmatpush2.bf16.msra.mxu0 0
    %600 = vmatprep.subr.bf16.mxu0 0
    %601 = vmatpush2.bf16.msra.mxu0 0
    %602 = vmatprep.subr.bf16.mxu0 0
    %603 = vmatpush2.bf16.msra.mxu0 0
    %604 = vmatprep.mubr.bf16.mxu0 0
    %605 = vmatmul.mubr.bf16.gmra.mxu0 %v553
    %v606 = vpop.f32.mrf.mxu0
    %v607 = vadd.f32 %v570, %v606
    %v608 = vpop.f32.mrf.mxu0
    %v609 = vpop.f32.mrf.mxu0
    %v610 = vadd.f32 %v570, %v609
    %v611 = vpop.f32.mrf.mxu0
    %612 = vmatprep.mubr.bf16.mxu0 0
    %613 = vmatmul.mubr.bf16.gmra.mxu0 %v554
    %v614 = vpop.f32.mrf.mxu0
    %v615 = vadd.f32 %v570, %v614
    %v616 = vpop.f32.mrf.mxu0
    %v617 = vpop.f32.mrf.mxu0
    %v618 = vadd.f32 %v570, %v617
    %v619 = vpop.f32.mrf.mxu0
    %620 = vmatprep.mubr.bf16.mxu0 0
    %621 = vmatmul.mubr.bf16.gmra.mxu0 %v555
    %v622 = vpop.f32.mrf.mxu0
    %v623 = vadd.f32 %v570, %v622
    %v624 = vpop.f32.mrf.mxu0
    %v625 = vpop.f32.mrf.mxu0
    %v626 = vadd.f32 %v570, %v625
    %v627 = vpop.f32.mrf.mxu0
    %628 = vmatprep.mubr.bf16.mxu0 0
    %629 = vmatmul.mubr.bf16.gmra.mxu0 %v556
    %v630 = vpop.f32.mrf.mxu0
    %v631 = vadd.f32 %v570, %v630
    %v632 = vpop.f32.mrf.mxu0
    %v633 = vpop.f32.mrf.mxu0
    %v634 = vadd.f32 %v570, %v633
    %v635 = vpop.f32.mrf.mxu0
    %636 = vdwg.mxu0
    %s637 = scalar_lea.vmem %s9, 2
    %v638 = vld [vmem:[%s637] sm:$0x1]
    %s639 = scalar_lea.vmem %s10, 2
    %v640 = vld [vmem:[%s639] sm:$0x1]
    %v641 = vadd.f32 %v607, %v610
    %v642 = vadd.f32 %v641, %v615
    %v643 = vadd.f32 %v642, %v618
    %v644 = vadd.f32 %v643, %v623
    %v645 = vadd.f32 %v644, %v626
    %v646 = vadd.f32 %v645, %v631
    %v647 = vadd.f32 %v646, %v634
    %v648 = vrot.slane %v647, 4
    %v649 = vadd.f32 %v647, %v648
    %v650 = vrot.slane %v649, 2
    %v651 = vadd.f32 %v649, %v650
    %v652 = vrot.slane %v651, 1
    %v653 = vadd.f32 %v651, %v652
    %v654 = vmul.f32 %v653, %v265
    %v655 = vsub.f32 %v607, %v654
    %v656 = vsub.f32 %v610, %v654
    %v657 = vsub.f32 %v615, %v654
    %v658 = vsub.f32 %v618, %v654
    %v659 = vsub.f32 %v623, %v654
    %v660 = vsub.f32 %v626, %v654
    %v661 = vsub.f32 %v631, %v654
    %v662 = vsub.f32 %v634, %v654
    %v663 = vmul.f32 %v655, %v655
    %v664 = vmul.f32 %v656, %v656
    %v665 = vmul.f32 %v657, %v657
    %v666 = vmul.f32 %v658, %v658
    %v667 = vmul.f32 %v659, %v659
    %v668 = vmul.f32 %v660, %v660
    %v669 = vmul.f32 %v661, %v661
    %v670 = vmul.f32 %v662, %v662
    %v671 = vadd.f32 %v663, %v664
    %v672 = vadd.f32 %v671, %v665
    %v673 = vadd.f32 %v672, %v666
    %v674 = vadd.f32 %v673, %v667
    %v675 = vadd.f32 %v674, %v668
    %v676 = vadd.f32 %v675, %v669
    %v677 = vadd.f32 %v676, %v670
    %v678 = vrot.slane %v677, 4
    %v679 = vadd.f32 %v677, %v678
    %v680 = vrot.slane %v679, 2
    %v681 = vadd.f32 %v679, %v680
    %v682 = vrot.slane %v681, 1
    %v683 = vadd.f32 %v681, %v682
    %v684 = vmul.f32 %v683, %v265
    %v685 = vadd.f32 %v684, 1e-05
    %v686 = vrsqrt.pop %v685
    %v687 = vmul.f32 %v655, %v686
    %v688 = vmul.f32 %v656, %v686
    %v689 = vmul.f32 %v657, %v686
    %v690 = vmul.f32 %v658, %v686
    %v691 = vmul.f32 %v659, %v686
    %v692 = vmul.f32 %v660, %v686
    %v693 = vmul.f32 %v661, %v686
    %v694 = vmul.f32 %v662, %v686
    %v696 = vlaneseq
    %v697 = vshrl.u32 %v696, 7
    %v698 = vsub.s32 0, %v697
    %v699 = vrot.slane %v638, %v698
    %v701 = vmul.f32 %v687, %v699
    %v702 = vmul.f32 %v688, %v699
    %v703 = vmul.f32 %v689, %v699
    %v704 = vmul.f32 %v690, %v699
    %v705 = vmul.f32 %v691, %v699
    %v706 = vmul.f32 %v692, %v699
    %v707 = vmul.f32 %v693, %v699
    %v708 = vmul.f32 %v694, %v699
    %v710 = vlaneseq
    %v711 = vshrl.u32 %v710, 7
    %v712 = vsub.s32 0, %v711
    %v713 = vrot.slane %v640, %v712
    %v715 = vadd.f32 %v701, %v713
    %v716 = vadd.f32 %v702, %v713
    %v717 = vadd.f32 %v703, %v713
    %v718 = vadd.f32 %v704, %v713
    %v719 = vadd.f32 %v705, %v713
    %v720 = vadd.f32 %v706, %v713
    %v721 = vadd.f32 %v707, %v713
    %v722 = vadd.f32 %v708, %v713
    %v723 = vmax.f32 %v715, 0.0
    %v724 = vmax.f32 %v716, 0.0
    %v725 = vmax.f32 %v717, 0.0
    %v726 = vmax.f32 %v718, 0.0
    %v727 = vmax.f32 %v719, 0.0
    %v728 = vmax.f32 %v720, 0.0
    %v729 = vmax.f32 %v721, 0.0
    %v730 = vmax.f32 %v722, 0.0
    %v731 = vld [vmem:[#allocation10] sm:$0xff]
    %v732 = vld [vmem:[#allocation10 + $0x8] sm:$0xff]
    %v733 = vld [vmem:[#allocation10 + $0x10] sm:$0xff]
    %v734 = vld [vmem:[#allocation10 + $0x18] sm:$0xff]
    %v735 = vld [vmem:[#allocation10 + $0x20] sm:$0xff]
    %v736 = vld [vmem:[#allocation10 + $0x28] sm:$0xff]
    %v737 = vld [vmem:[#allocation10 + $0x30] sm:$0xff]
    %v738 = vld [vmem:[#allocation10 + $0x38] sm:$0xff]
    %v739 = vld [vmem:[#allocation10 + $0x40] sm:$0xff]
    %v740 = vld [vmem:[#allocation10 + $0x48] sm:$0xff]
    %v741 = vld [vmem:[#allocation10 + $0x50] sm:$0xff]
    %v742 = vld [vmem:[#allocation10 + $0x58] sm:$0xff]
    %v743 = vld [vmem:[#allocation10 + $0x60] sm:$0xff]
    %v744 = vld [vmem:[#allocation10 + $0x68] sm:$0xff]
    %v745 = vld [vmem:[#allocation10 + $0x70] sm:$0xff]
    %v746 = vld [vmem:[#allocation10 + $0x78] sm:$0xff]
    %v747 = vpack.c.bf16 %v724, %v723
    %v748 = vpack.c.bf16 %v726, %v725
    %v749 = vpack.c.bf16 %v728, %v727
    %v750 = vpack.c.bf16 %v730, %v729
    %v751 = vpack.c.bf16 %v732, %v731
    %v752 = vpack.c.bf16 %v734, %v733
    %v753 = vpack.c.bf16 %v736, %v735
    %v754 = vpack.c.bf16 %v738, %v737
    %v755 = vpack.c.bf16 %v740, %v739
    %v756 = vpack.c.bf16 %v742, %v741
    %v757 = vpack.c.bf16 %v744, %v743
    %v758 = vpack.c.bf16 %v746, %v745
    %v759 = vld [vmem:[#allocation11] sm:$0x1]
    %v761 = vlaneseq
    %v762 = vshrl.u32 %v761, 7
    %v763 = vsub.s32 0, %v762
    %v764 = vrot.slane %v759, %v763
    %766 = vmatprep.subr.bf16.mxu0 0
    %767 = vmatpush1.bf16.msra.mxu0 %v758
    %768 = vmatprep.subr.bf16.mxu0 0
    %769 = vmatpush1.bf16.msra.mxu0 %v757
    %770 = vmatprep.subr.bf16.mxu0 0
    %771 = vmatpush1.bf16.msra.mxu0 %v756
    %772 = vmatprep.subr.bf16.mxu0 0
    %773 = vmatpush1.bf16.msra.mxu0 %v755
    %774 = vmatprep.subr.bf16.mxu0 0
    %775 = vmatpush1.bf16.msra.mxu0 %v754
    %776 = vmatprep.subr.bf16.mxu0 0
    %777 = vmatpush1.bf16.msra.mxu0 %v753
    %778 = vmatprep.subr.bf16.mxu0 0
    %779 = vmatpush1.bf16.msra.mxu0 %v752
    %780 = vmatprep.subr.bf16.mxu0 0
    %781 = vmatpush1.bf16.msra.mxu0 %v751
    %782 = vmatprep.subr.bf16.mxu0 0
    %783 = vmatpush2.bf16.msra.mxu0 0
    %784 = vmatprep.subr.bf16.mxu0 0
    %785 = vmatpush2.bf16.msra.mxu0 0
    %786 = vmatprep.subr.bf16.mxu0 0
    %787 = vmatpush2.bf16.msra.mxu0 0
    %788 = vmatprep.subr.bf16.mxu0 0
    %789 = vmatpush2.bf16.msra.mxu0 0
    %790 = vmatprep.subr.bf16.mxu0 0
    %791 = vmatpush2.bf16.msra.mxu0 0
    %792 = vmatprep.subr.bf16.mxu0 0
    %793 = vmatpush2.bf16.msra.mxu0 0
    %794 = vmatprep.subr.bf16.mxu0 0
    %795 = vmatpush2.bf16.msra.mxu0 0
    %796 = vmatprep.subr.bf16.mxu0 0
    %797 = vmatpush2.bf16.msra.mxu0 0
    %798 = vmatprep.mubr.bf16.mxu0 0
    %799 = vmatmul.mubr.bf16.gmra.mxu0 %v747
    %v800 = vpop.f32.mrf.mxu0
    %v801 = vadd.f32 %v764, %v800
    %v802 = vpop.f32.mrf.mxu0
    %v803 = vpop.f32.mrf.mxu0
    %v804 = vadd.f32 %v764, %v803
    %v805 = vpop.f32.mrf.mxu0
    %806 = vmatprep.mubr.bf16.mxu0 0
    %807 = vmatmul.mubr.bf16.gmra.mxu0 %v748
    %v808 = vpop.f32.mrf.mxu0
    %v809 = vadd.f32 %v764, %v808
    %v810 = vpop.f32.mrf.mxu0
    %v811 = vpop.f32.mrf.mxu0
    %v812 = vadd.f32 %v764, %v811
    %v813 = vpop.f32.mrf.mxu0
    %814 = vmatprep.mubr.bf16.mxu0 0
    %815 = vmatmul.mubr.bf16.gmra.mxu0 %v749
    %v816 = vpop.f32.mrf.mxu0
    %v817 = vadd.f32 %v764, %v816
    %v818 = vpop.f32.mrf.mxu0
    %v819 = vpop.f32.mrf.mxu0
    %v820 = vadd.f32 %v764, %v819
    %v821 = vpop.f32.mrf.mxu0
    %822 = vmatprep.mubr.bf16.mxu0 0
    %823 = vmatmul.mubr.bf16.gmra.mxu0 %v750
    %v824 = vpop.f32.mrf.mxu0
    %v825 = vadd.f32 %v764, %v824
    %v826 = vpop.f32.mrf.mxu0
    %v827 = vpop.f32.mrf.mxu0
    %v828 = vadd.f32 %v764, %v827
    %v829 = vpop.f32.mrf.mxu0
    %830 = vdwg.mxu0
    %s831 = scalar_lea.vmem %s9, 3
    %v832 = vld [vmem:[%s831] sm:$0x1]
    %s833 = scalar_lea.vmem %s10, 3
    %v834 = vld [vmem:[%s833] sm:$0x1]
    %v835 = vadd.f32 %v801, %v804
    %v836 = vadd.f32 %v835, %v809
    %v837 = vadd.f32 %v836, %v812
    %v838 = vadd.f32 %v837, %v817
    %v839 = vadd.f32 %v838, %v820
    %v840 = vadd.f32 %v839, %v825
    %v841 = vadd.f32 %v840, %v828
    %v842 = vrot.slane %v841, 4
    %v843 = vadd.f32 %v841, %v842
    %v844 = vrot.slane %v843, 2
    %v845 = vadd.f32 %v843, %v844
    %v846 = vrot.slane %v845, 1
    %v847 = vadd.f32 %v845, %v846
    %v848 = vmul.f32 %v847, %v265
    %v849 = vsub.f32 %v801, %v848
    %v850 = vsub.f32 %v804, %v848
    %v851 = vsub.f32 %v809, %v848
    %v852 = vsub.f32 %v812, %v848
    %v853 = vsub.f32 %v817, %v848
    %v854 = vsub.f32 %v820, %v848
    %v855 = vsub.f32 %v825, %v848
    %v856 = vsub.f32 %v828, %v848
    %v857 = vmul.f32 %v849, %v849
    %v858 = vmul.f32 %v850, %v850
    %v859 = vmul.f32 %v851, %v851
    %v860 = vmul.f32 %v852, %v852
    %v861 = vmul.f32 %v853, %v853
    %v862 = vmul.f32 %v854, %v854
    %v863 = vmul.f32 %v855, %v855
    %v864 = vmul.f32 %v856, %v856
    %v865 = vadd.f32 %v857, %v858
    %v866 = vadd.f32 %v865, %v859
    %v867 = vadd.f32 %v866, %v860
    %v868 = vadd.f32 %v867, %v861
    %v869 = vadd.f32 %v868, %v862
    %v870 = vadd.f32 %v869, %v863
    %v871 = vadd.f32 %v870, %v864
    %v872 = vrot.slane %v871, 4
    %v873 = vadd.f32 %v871, %v872
    %v874 = vrot.slane %v873, 2
    %v875 = vadd.f32 %v873, %v874
    %v876 = vrot.slane %v875, 1
    %v877 = vadd.f32 %v875, %v876
    %v878 = vmul.f32 %v877, %v265
    %v879 = vadd.f32 %v878, 1e-05
    %v880 = vrsqrt.pop %v879
    %v881 = vmul.f32 %v849, %v880
    %v882 = vmul.f32 %v850, %v880
    %v883 = vmul.f32 %v851, %v880
    %v884 = vmul.f32 %v852, %v880
    %v885 = vmul.f32 %v853, %v880
    %v886 = vmul.f32 %v854, %v880
    %v887 = vmul.f32 %v855, %v880
    %v888 = vmul.f32 %v856, %v880
    %v890 = vlaneseq
    %v891 = vshrl.u32 %v890, 7
    %v892 = vsub.s32 0, %v891
    %v893 = vrot.slane %v832, %v892
    %v895 = vmul.f32 %v881, %v893
    %v896 = vmul.f32 %v882, %v893
    %v897 = vmul.f32 %v883, %v893
    %v898 = vmul.f32 %v884, %v893
    %v899 = vmul.f32 %v885, %v893
    %v900 = vmul.f32 %v886, %v893
    %v901 = vmul.f32 %v887, %v893
    %v902 = vmul.f32 %v888, %v893
    %v904 = vlaneseq
    %v905 = vshrl.u32 %v904, 7
    %v906 = vsub.s32 0, %v905
    %v907 = vrot.slane %v834, %v906
    %v909 = vadd.f32 %v895, %v907
    %v910 = vadd.f32 %v896, %v907
    %v911 = vadd.f32 %v897, %v907
    %v912 = vadd.f32 %v898, %v907
    %v913 = vadd.f32 %v899, %v907
    %v914 = vadd.f32 %v900, %v907
    %v915 = vadd.f32 %v901, %v907
    %v916 = vadd.f32 %v902, %v907
    %v917 = vmax.f32 %v909, 0.0
    %v918 = vmax.f32 %v910, 0.0
    %v919 = vmax.f32 %v911, 0.0
    %v920 = vmax.f32 %v912, 0.0
    %v921 = vmax.f32 %v913, 0.0
    %v922 = vmax.f32 %v914, 0.0
    %v923 = vmax.f32 %v915, 0.0
    %v924 = vmax.f32 %v916, 0.0
    %v925 = vld [vmem:[%s11] sm:$0xff]
    %v926 = vld [vmem:[%s11 + $0x8] sm:$0xff]
    %v927 = vpack.c.bf16 %v926, %v925
    %v928 = vld [vmem:[%s12] sm:$0x1]
    %v930 = vlaneseq
    %v931 = vshrl.u32 %v930, 7
    %v932 = vsub.s32 0, %v931
    %v933 = vrot.slane %v928, %v932
    %935 = vmatprep.subr.bf16.mxu0 0
    %936 = vmatpush1.bf16.msra.mxu0 0
    %937 = vmatprep.subr.bf16.mxu0 0
    %938 = vmatpush1.bf16.msra.mxu0 0
    %939 = vmatprep.subr.bf16.mxu0 0
    %940 = vmatpush1.bf16.msra.mxu0 0
    %941 = vmatprep.subr.bf16.mxu0 0
    %942 = vmatpush1.bf16.msra.mxu0 0
    %943 = vmatprep.subr.bf16.mxu0 0
    %944 = vmatpush1.bf16.msra.mxu0 0
    %945 = vmatprep.subr.bf16.mxu0 0
    %946 = vmatpush1.bf16.msra.mxu0 0
    %947 = vmatprep.subr.bf16.mxu0 0
    %948 = vmatpush1.bf16.msra.mxu0 0
    %949 = vmatprep.subr.bf16.mxu0 0
    %950 = vmatpush1.bf16.msra.mxu0 %v927
    %951 = vmatprep.subr.bf16.mxu0 0
    %952 = vmatpush2.bf16.msra.mxu0 0
    %953 = vmatprep.subr.bf16.mxu0 0
    %954 = vmatpush2.bf16.msra.mxu0 0
    %955 = vmatprep.subr.bf16.mxu0 0
    %956 = vmatpush2.bf16.msra.mxu0 0
    %957 = vmatprep.subr.bf16.mxu0 0
    %958 = vmatpush2.bf16.msra.mxu0 0
    %959 = vmatprep.subr.bf16.mxu0 0
    %960 = vmatpush2.bf16.msra.mxu0 0
    %961 = vmatprep.subr.bf16.mxu0 0
    %962 = vmatpush2.bf16.msra.mxu0 0
    %963 = vmatprep.subr.bf16.mxu0 0
    %964 = vmatpush2.bf16.msra.mxu0 0
    %965 = vmatprep.subr.bf16.mxu0 0
    %966 = vmatpush2.bf16.msra.mxu0 0
    %967 = vmatprep.mubr.bf16.mxu0 0
    %968 = vmatmul.mubr.bf16.gmra.mxu0 %v174
    %v969 = vpop.f32.mrf.mxu0
    %v970 = vadd.f32 %v933, %v969
    %v971 = vpop.f32.mrf.mxu0
    %v972 = vpop.f32.mrf.mxu0
    %v973 = vadd.f32 %v933, %v972
    %v974 = vpop.f32.mrf.mxu0
    %975 = vmatprep.mubr.bf16.mxu0 0
    %976 = vmatmul.mubr.bf16.gmra.mxu0 %v177
    %v977 = vpop.f32.mrf.mxu0
    %v978 = vadd.f32 %v933, %v977
    %v979 = vpop.f32.mrf.mxu0
    %v980 = vpop.f32.mrf.mxu0
    %v981 = vadd.f32 %v933, %v980
    %v982 = vpop.f32.mrf.mxu0
    %983 = vmatprep.mubr.bf16.mxu0 0
    %984 = vmatmul.mubr.bf16.gmra.mxu0 %v180
    %v985 = vpop.f32.mrf.mxu0
    %v986 = vadd.f32 %v933, %v985
    %v987 = vpop.f32.mrf.mxu0
    %v988 = vpop.f32.mrf.mxu0
    %v989 = vadd.f32 %v933, %v988
    %v990 = vpop.f32.mrf.mxu0
    %991 = vmatprep.mubr.bf16.mxu0 0
    %992 = vmatmul.mubr.bf16.gmra.mxu0 %v183
    %v993 = vpop.f32.mrf.mxu0
    %v994 = vadd.f32 %v933, %v993
    %v995 = vpop.f32.mrf.mxu0
    %v996 = vpop.f32.mrf.mxu0
    %v997 = vadd.f32 %v933, %v996
    %v998 = vpop.f32.mrf.mxu0
    %999 = vdwg.mxu0
    %v1000 = vmul.f32 %v150, %v970
    %v1001 = vmul.f32 %v151, %v973
    %v1002 = vmul.f32 %v152, %v978
    %v1003 = vmul.f32 %v153, %v981
    %v1004 = vmul.f32 %v154, %v986
    %v1005 = vmul.f32 %v155, %v989
    %v1006 = vmul.f32 %v156, %v994
    %v1007 = vmul.f32 %v157, %v997
    %v1008 = vadd.f32 %v1000, %v150
    %v1009 = vadd.f32 %v1001, %v151
    %v1010 = vadd.f32 %v1002, %v152
    %v1011 = vadd.f32 %v1003, %v153
    %v1012 = vadd.f32 %v1004, %v154
    %v1013 = vadd.f32 %v1005, %v155
    %v1014 = vadd.f32 %v1006, %v156
    %v1015 = vadd.f32 %v1007, %v157
    %v1016 = vld [vmem:[%s13] sm:$0x1]
    %v1017 = vld [vmem:[%s14] sm:$0x1]
    %v1018 = vsel %vm172, %v1008, 0.0
    %1019 = vadd.xlane.f32.xlu0 %v1018
    %v1020 = vpop.xlane.xlu0 %1019
    %v1021 = vsel %vm172, %v1009, 0.0
    %1022 = vadd.xlane.f32.xlu0 %v1021
    %v1023 = vpop.xlane.xlu0 %1022
    %v1024 = vsel %vm172, %v1010, 0.0
    %1025 = vadd.xlane.f32.xlu0 %v1024
    %v1026 = vpop.xlane.xlu0 %1025
    %v1027 = vsel %vm172, %v1011, 0.0
    %1028 = vadd.xlane.f32.xlu0 %v1027
    %v1029 = vpop.xlane.xlu0 %1028
    %v1030 = vsel %vm172, %v1012, 0.0
    %1031 = vadd.xlane.f32.xlu0 %v1030
    %v1032 = vpop.xlane.xlu0 %1031
    %v1033 = vsel %vm172, %v1013, 0.0
    %1034 = vadd.xlane.f32.xlu0 %v1033
    %v1035 = vpop.xlane.xlu0 %1034
    %v1036 = vsel %vm172, %v1014, 0.0
    %1037 = vadd.xlane.f32.xlu0 %v1036
    %v1038 = vpop.xlane.xlu0 %1037
    %v1039 = vsel %vm172, %v1015, 0.0
    %1040 = vadd.xlane.f32.xlu0 %v1039
    %v1041 = vpop.xlane.xlu0 %1040
    %v1042 = vrcp.pop 16.0
    %v1043 = vmul.f32 %v1020, %v1042
    %v1044 = vmul.f32 %v1023, %v1042
    %v1045 = vmul.f32 %v1026, %v1042
    %v1046 = vmul.f32 %v1029, %v1042
    %v1047 = vmul.f32 %v1032, %v1042
    %v1048 = vmul.f32 %v1035, %v1042
    %v1049 = vmul.f32 %v1038, %v1042
    %v1050 = vmul.f32 %v1041, %v1042
    %v1051 = vsub.f32 %v1008, %v1043
    %v1052 = vsub.f32 %v1009, %v1044
    %v1053 = vsub.f32 %v1010, %v1045
    %v1054 = vsub.f32 %v1011, %v1046
    %v1055 = vsub.f32 %v1012, %v1047
    %v1056 = vsub.f32 %v1013, %v1048
    %v1057 = vsub.f32 %v1014, %v1049
    %v1058 = vsub.f32 %v1015, %v1050
    %v1059 = vmul.f32 %v1051, %v1051
    %v1060 = vmul.f32 %v1052, %v1052
    %v1061 = vmul.f32 %v1053, %v1053
    %v1062 = vmul.f32 %v1054, %v1054
    %v1063 = vmul.f32 %v1055, %v1055
    %v1064 = vmul.f32 %v1056, %v1056
    %v1065 = vmul.f32 %v1057, %v1057
    %v1066 = vmul.f32 %v1058, %v1058
    %v1067 = vsel %vm172, %v1059, 0.0
    %1068 = vadd.xlane.f32.xlu0 %v1067
    %v1069 = vpop.xlane.xlu0 %1068
    %v1070 = vsel %vm172, %v1060, 0.0
    %1071 = vadd.xlane.f32.xlu0 %v1070
    %v1072 = vpop.xlane.xlu0 %1071
    %v1073 = vsel %vm172, %v1061, 0.0
    %1074 = vadd.xlane.f32.xlu0 %v1073
    %v1075 = vpop.xlane.xlu0 %1074
    %v1076 = vsel %vm172, %v1062, 0.0
    %1077 = vadd.xlane.f32.xlu0 %v1076
    %v1078 = vpop.xlane.xlu0 %1077
    %v1079 = vsel %vm172, %v1063, 0.0
    %1080 = vadd.xlane.f32.xlu0 %v1079
    %v1081 = vpop.xlane.xlu0 %1080
    %v1082 = vsel %vm172, %v1064, 0.0
    %1083 = vadd.xlane.f32.xlu0 %v1082
    %v1084 = vpop.xlane.xlu0 %1083
    %v1085 = vsel %vm172, %v1065, 0.0
    %1086 = vadd.xlane.f32.xlu0 %v1085
    %v1087 = vpop.xlane.xlu0 %1086
    %v1088 = vsel %vm172, %v1066, 0.0
    %1089 = vadd.xlane.f32.xlu0 %v1088
    %v1090 = vpop.xlane.xlu0 %1089
    %v1091 = vmul.f32 %v1069, %v1042
    %v1092 = vmul.f32 %v1072, %v1042
    %v1093 = vmul.f32 %v1075, %v1042
    %v1094 = vmul.f32 %v1078, %v1042
    %v1095 = vmul.f32 %v1081, %v1042
    %v1096 = vmul.f32 %v1084, %v1042
    %v1097 = vmul.f32 %v1087, %v1042
    %v1098 = vmul.f32 %v1090, %v1042
    %v1099 = vadd.f32 %v1091, 1e-05
    %v1100 = vadd.f32 %v1092, 1e-05
    %v1101 = vadd.f32 %v1093, 1e-05
    %v1102 = vadd.f32 %v1094, 1e-05
    %v1103 = vadd.f32 %v1095, 1e-05
    %v1104 = vadd.f32 %v1096, 1e-05
    %v1105 = vadd.f32 %v1097, 1e-05
    %v1106 = vadd.f32 %v1098, 1e-05
    %v1107 = vrsqrt.pop %v1099
    %v1108 = vrsqrt.pop %v1100
    %v1109 = vrsqrt.pop %v1101
    %v1110 = vrsqrt.pop %v1102
    %v1111 = vrsqrt.pop %v1103
    %v1112 = vrsqrt.pop %v1104
    %v1113 = vrsqrt.pop %v1105
    %v1114 = vrsqrt.pop %v1106
    %v1115 = vmul.f32 %v1051, %v1107
    %v1116 = vmul.f32 %v1052, %v1108
    %v1117 = vmul.f32 %v1053, %v1109
    %v1118 = vmul.f32 %v1054, %v1110
    %v1119 = vmul.f32 %v1055, %v1111
    %v1120 = vmul.f32 %v1056, %v1112
    %v1121 = vmul.f32 %v1057, %v1113
    %v1122 = vmul.f32 %v1058, %v1114
    %v1124 = vlaneseq
    %v1125 = vshrl.u32 %v1124, 7
    %v1126 = vsub.s32 0, %v1125
    %v1127 = vrot.slane %v1016, %v1126
    %v1129 = vmul.f32 %v1115, %v1127
    %v1130 = vmul.f32 %v1116, %v1127
    %v1131 = vmul.f32 %v1117, %v1127
    %v1132 = vmul.f32 %v1118, %v1127
    %v1133 = vmul.f32 %v1119, %v1127
    %v1134 = vmul.f32 %v1120, %v1127
    %v1135 = vmul.f32 %v1121, %v1127
    %v1136 = vmul.f32 %v1122, %v1127
    %v1138 = vlaneseq
    %v1139 = vshrl.u32 %v1138, 7
    %v1140 = vsub.s32 0, %v1139
    %v1141 = vrot.slane %v1017, %v1140
    %v1143 = vadd.f32 %v1129, %v1141
    %v1144 = vadd.f32 %v1130, %v1141
    %v1145 = vadd.f32 %v1131, %v1141
    %v1146 = vadd.f32 %v1132, %v1141
    %v1147 = vadd.f32 %v1133, %v1141
    %v1148 = vadd.f32 %v1134, %v1141
    %v1149 = vadd.f32 %v1135, %v1141
    %v1150 = vadd.f32 %v1136, %v1141
    %s1151 = scalar_lea.vmem %s11, 16
    %v1152 = vld [vmem:[%s1151] sm:$0xff]
    %v1153 = vld [vmem:[%s1151 + $0x8] sm:$0xff]
    %v1154 = vpack.c.bf16 %v1144, %v1143
    %v1155 = vpack.c.bf16 %v1146, %v1145
    %v1156 = vpack.c.bf16 %v1148, %v1147
    %v1157 = vpack.c.bf16 %v1150, %v1149
    %v1158 = vpack.c.bf16 %v1153, %v1152
    %s1159 = scalar_lea.vmem %s12, 1
    %v1160 = vld [vmem:[%s1159] sm:$0x1]
    %v1162 = vlaneseq
    %v1163 = vshrl.u32 %v1162, 7
    %v1164 = vsub.s32 0, %v1163
    %v1165 = vrot.slane %v1160, %v1164
    %v1168 = vsel %vm172, %v1154, 0
    %v1171 = vsel %vm172, %v1155, 0
    %v1174 = vsel %vm172, %v1156, 0
    %v1177 = vsel %vm172, %v1157, 0
    %1179 = vmatprep.subr.bf16.mxu0 0
    %1180 = vmatpush1.bf16.msra.mxu0 0
    %1181 = vmatprep.subr.bf16.mxu0 0
    %1182 = vmatpush1.bf16.msra.mxu0 0
    %1183 = vmatprep.subr.bf16.mxu0 0
    %1184 = vmatpush1.bf16.msra.mxu0 0
    %1185 = vmatprep.subr.bf16.mxu0 0
    %1186 = vmatpush1.bf16.msra.mxu0 0
    %1187 = vmatprep.subr.bf16.mxu0 0
    %1188 = vmatpush1.bf16.msra.mxu0 0
    %1189 = vmatprep.subr.bf16.mxu0 0
    %1190 = vmatpush1.bf16.msra.mxu0 0
    %1191 = vmatprep.subr.bf16.mxu0 0
    %1192 = vmatpush1.bf16.msra.mxu0 0
    %1193 = vmatprep.subr.bf16.mxu0 0
    %1194 = vmatpush1.bf16.msra.mxu0 %v1158
    %1195 = vmatprep.subr.bf16.mxu0 0
    %1196 = vmatpush2.bf16.msra.mxu0 0
    %1197 = vmatprep.subr.bf16.mxu0 0
    %1198 = vmatpush2.bf16.msra.mxu0 0
    %1199 = vmatprep.subr.bf16.mxu0 0
    %1200 = vmatpush2.bf16.msra.mxu0 0
    %1201 = vmatprep.subr.bf16.mxu0 0
    %1202 = vmatpush2.bf16.msra.mxu0 0
    %1203 = vmatprep.subr.bf16.mxu0 0
    %1204 = vmatpush2.bf16.msra.mxu0 0
    %1205 = vmatprep.subr.bf16.mxu0 0
    %1206 = vmatpush2.bf16.msra.mxu0 0
    %1207 = vmatprep.subr.bf16.mxu0 0
    %1208 = vmatpush2.bf16.msra.mxu0 0
    %1209 = vmatprep.subr.bf16.mxu0 0
    %1210 = vmatpush2.bf16.msra.mxu0 0
    %1211 = vmatprep.mubr.bf16.mxu0 0
    %1212 = vmatmul.mubr.bf16.gmra.mxu0 %v1168
    %v1213 = vpop.f32.mrf.mxu0
    %v1214 = vadd.f32 %v1165, %v1213
    %v1215 = vpop.f32.mrf.mxu0
    %v1216 = vpop.f32.mrf.mxu0
    %v1217 = vadd.f32 %v1165, %v1216
    %v1218 = vpop.f32.mrf.mxu0
    %1219 = vmatprep.mubr.bf16.mxu0 0
    %1220 = vmatmul.mubr.bf16.gmra.mxu0 %v1171
    %v1221 = vpop.f32.mrf.mxu0
    %v1222 = vadd.f32 %v1165, %v1221
    %v1223 = vpop.f32.mrf.mxu0
    %v1224 = vpop.f32.mrf.mxu0
    %v1225 = vadd.f32 %v1165, %v1224
    %v1226 = vpop.f32.mrf.mxu0
    %1227 = vmatprep.mubr.bf16.mxu0 0
    %1228 = vmatmul.mubr.bf16.gmra.mxu0 %v1174
    %v1229 = vpop.f32.mrf.mxu0
    %v1230 = vadd.f32 %v1165, %v1229
    %v1231 = vpop.f32.mrf.mxu0
    %v1232 = vpop.f32.mrf.mxu0
    %v1233 = vadd.f32 %v1165, %v1232
    %v1234 = vpop.f32.mrf.mxu0
    %1235 = vmatprep.mubr.bf16.mxu0 0
    %1236 = vmatmul.mubr.bf16.gmra.mxu0 %v1177
    %v1237 = vpop.f32.mrf.mxu0
    %v1238 = vadd.f32 %v1165, %v1237
    %v1239 = vpop.f32.mrf.mxu0
    %v1240 = vpop.f32.mrf.mxu0
    %v1241 = vadd.f32 %v1165, %v1240
    %v1242 = vpop.f32.mrf.mxu0
    %1243 = vdwg.mxu0
    %v1244 = vmul.f32 %v150, %v1214
    %v1245 = vmul.f32 %v151, %v1217
    %v1246 = vmul.f32 %v152, %v1222
    %v1247 = vmul.f32 %v153, %v1225
    %v1248 = vmul.f32 %v154, %v1230
    %v1249 = vmul.f32 %v155, %v1233
    %v1250 = vmul.f32 %v156, %v1238
    %v1251 = vmul.f32 %v157, %v1241
    %v1252 = vadd.f32 %v1244, %v1143
    %v1253 = vadd.f32 %v1245, %v1144
    %v1254 = vadd.f32 %v1246, %v1145
    %v1255 = vadd.f32 %v1247, %v1146
    %v1256 = vadd.f32 %v1248, %v1147
    %v1257 = vadd.f32 %v1249, %v1148
    %v1258 = vadd.f32 %v1250, %v1149
    %v1259 = vadd.f32 %v1251, %v1150
    %s1260 = scalar_lea.vmem %s13, 1
    %v1261 = vld [vmem:[%s1260] sm:$0x1]
    %s1262 = scalar_lea.vmem %s14, 1
    %v1263 = vld [vmem:[%s1262] sm:$0x1]
    %v1264 = vsel %vm172, %v1252, 0.0
    %1265 = vadd.xlane.f32.xlu0 %v1264
    %v1266 = vpop.xlane.xlu0 %1265
    %v1267 = vsel %vm172, %v1253, 0.0
    %1268 = vadd.xlane.f32.xlu0 %v1267
    %v1269 = vpop.xlane.xlu0 %1268
    %v1270 = vsel %vm172, %v1254, 0.0
    %1271 = vadd.xlane.f32.xlu0 %v1270
    %v1272 = vpop.xlane.xlu0 %1271
    %v1273 = vsel %vm172, %v1255, 0.0
    %1274 = vadd.xlane.f32.xlu0 %v1273
    %v1275 = vpop.xlane.xlu0 %1274
    %v1276 = vsel %vm172, %v1256, 0.0
    %1277 = vadd.xlane.f32.xlu0 %v1276
    %v1278 = vpop.xlane.xlu0 %1277
    %v1279 = vsel %vm172, %v1257, 0.0
    %1280 = vadd.xlane.f32.xlu0 %v1279
    %v1281 = vpop.xlane.xlu0 %1280
    %v1282 = vsel %vm172, %v1258, 0.0
    %1283 = vadd.xlane.f32.xlu0 %v1282
    %v1284 = vpop.xlane.xlu0 %1283
    %v1285 = vsel %vm172, %v1259, 0.0
    %1286 = vadd.xlane.f32.xlu0 %v1285
    %v1287 = vpop.xlane.xlu0 %1286
    %v1288 = vmul.f32 %v1266, %v1042
    %v1289 = vmul.f32 %v1269, %v1042
    %v1290 = vmul.f32 %v1272, %v1042
    %v1291 = vmul.f32 %v1275, %v1042
    %v1292 = vmul.f32 %v1278, %v1042
    %v1293 = vmul.f32 %v1281, %v1042
    %v1294 = vmul.f32 %v1284, %v1042
    %v1295 = vmul.f32 %v1287, %v1042
    %v1296 = vsub.f32 %v1252, %v1288
    %v1297 = vsub.f32 %v1253, %v1289
    %v1298 = vsub.f32 %v1254, %v1290
    %v1299 = vsub.f32 %v1255, %v1291
    %v1300 = vsub.f32 %v1256, %v1292
    %v1301 = vsub.f32 %v1257, %v1293
    %v1302 = vsub.f32 %v1258, %v1294
    %v1303 = vsub.f32 %v1259, %v1295
    %v1304 = vmul.f32 %v1296, %v1296
    %v1305 = vmul.f32 %v1297, %v1297
    %v1306 = vmul.f32 %v1298, %v1298
    %v1307 = vmul.f32 %v1299, %v1299
    %v1308 = vmul.f32 %v1300, %v1300
    %v1309 = vmul.f32 %v1301, %v1301
    %v1310 = vmul.f32 %v1302, %v1302
    %v1311 = vmul.f32 %v1303, %v1303
    %v1312 = vsel %vm172, %v1304, 0.0
    %1313 = vadd.xlane.f32.xlu0 %v1312
    %v1314 = vpop.xlane.xlu0 %1313
    %v1315 = vsel %vm172, %v1305, 0.0
    %1316 = vadd.xlane.f32.xlu0 %v1315
    %v1317 = vpop.xlane.xlu0 %1316
    %v1318 = vsel %vm172, %v1306, 0.0
    %1319 = vadd.xlane.f32.xlu0 %v1318
    %v1320 = vpop.xlane.xlu0 %1319
    %v1321 = vsel %vm172, %v1307, 0.0
    %1322 = vadd.xlane.f32.xlu0 %v1321
    %v1323 = vpop.xlane.xlu0 %1322
    %v1324 = vsel %vm172, %v1308, 0.0
    %1325 = vadd.xlane.f32.xlu0 %v1324
    %v1326 = vpop.xlane.xlu0 %1325
    %v1327 = vsel %vm172, %v1309, 0.0
    %1328 = vadd.xlane.f32.xlu0 %v1327
    %v1329 = vpop.xlane.xlu0 %1328
    %v1330 = vsel %vm172, %v1310, 0.0
    %1331 = vadd.xlane.f32.xlu0 %v1330
    %v1332 = vpop.xlane.xlu0 %1331
    %v1333 = vsel %vm172, %v1311, 0.0
    %1334 = vadd.xlane.f32.xlu0 %v1333
    %v1335 = vpop.xlane.xlu0 %1334
    %v1336 = vmul.f32 %v1314, %v1042
    %v1337 = vmul.f32 %v1317, %v1042
    %v1338 = vmul.f32 %v1320, %v1042
    %v1339 = vmul.f32 %v1323, %v1042
    %v1340 = vmul.f32 %v1326, %v1042
    %v1341 = vmul.f32 %v1329, %v1042
    %v1342 = vmul.f32 %v1332, %v1042
    %v1343 = vmul.f32 %v1335, %v1042
    %v1344 = vadd.f32 %v1336, 1e-05
    %v1345 = vadd.f32 %v1337, 1e-05
    %v1346 = vadd.f32 %v1338, 1e-05
    %v1347 = vadd.f32 %v1339, 1e-05
    %v1348 = vadd.f32 %v1340, 1e-05
    %v1349 = vadd.f32 %v1341, 1e-05
    %v1350 = vadd.f32 %v1342, 1e-05
    %v1351 = vadd.f32 %v1343, 1e-05
    %v1352 = vrsqrt.pop %v1344
    %v1353 = vrsqrt.pop %v1345
    %v1354 = vrsqrt.pop %v1346
    %v1355 = vrsqrt.pop %v1347
    %v1356 = vrsqrt.pop %v1348
    %v1357 = vrsqrt.pop %v1349
    %v1358 = vrsqrt.pop %v1350
    %v1359 = vrsqrt.pop %v1351
    %v1360 = vmul.f32 %v1296, %v1352
    %v1361 = vmul.f32 %v1297, %v1353
    %v1362 = vmul.f32 %v1298, %v1354
    %v1363 = vmul.f32 %v1299, %v1355
    %v1364 = vmul.f32 %v1300, %v1356
    %v1365 = vmul.f32 %v1301, %v1357
    %v1366 = vmul.f32 %v1302, %v1358
    %v1367 = vmul.f32 %v1303, %v1359
    %v1369 = vlaneseq
    %v1370 = vshrl.u32 %v1369, 7
    %v1371 = vsub.s32 0, %v1370
    %v1372 = vrot.slane %v1261, %v1371
    %v1374 = vmul.f32 %v1360, %v1372
    %v1375 = vmul.f32 %v1361, %v1372
    %v1376 = vmul.f32 %v1362, %v1372
    %v1377 = vmul.f32 %v1363, %v1372
    %v1378 = vmul.f32 %v1364, %v1372
    %v1379 = vmul.f32 %v1365, %v1372
    %v1380 = vmul.f32 %v1366, %v1372
    %v1381 = vmul.f32 %v1367, %v1372
    %v1383 = vlaneseq
    %v1384 = vshrl.u32 %v1383, 7
    %v1385 = vsub.s32 0, %v1384
    %v1386 = vrot.slane %v1263, %v1385
    %v1388 = vadd.f32 %v1374, %v1386
    %v1389 = vadd.f32 %v1375, %v1386
    %v1390 = vadd.f32 %v1376, %v1386
    %v1391 = vadd.f32 %v1377, %v1386
    %v1392 = vadd.f32 %v1378, %v1386
    %v1393 = vadd.f32 %v1379, %v1386
    %v1394 = vadd.f32 %v1380, %v1386
    %v1395 = vadd.f32 %v1381, %v1386
    %s1396 = scalar_lea.vmem %s11, 32
    %v1397 = vld [vmem:[%s1396] sm:$0xff]
    %v1398 = vld [vmem:[%s1396 + $0x8] sm:$0xff]
    %v1399 = vpack.c.bf16 %v1389, %v1388
    %v1400 = vpack.c.bf16 %v1391, %v1390
    %v1401 = vpack.c.bf16 %v1393, %v1392
    %v1402 = vpack.c.bf16 %v1395, %v1394
    %v1403 = vpack.c.bf16 %v1398, %v1397
    %s1404 = scalar_lea.vmem %s12, 2
    %v1405 = vld [vmem:[%s1404] sm:$0x1]
    %v1407 = vlaneseq
    %v1408 = vshrl.u32 %v1407, 7
    %v1409 = vsub.s32 0, %v1408
    %v1410 = vrot.slane %v1405, %v1409
    %v1413 = vsel %vm172, %v1399, 0
    %v1416 = vsel %vm172, %v1400, 0
    %v1419 = vsel %vm172, %v1401, 0
    %v1422 = vsel %vm172, %v1402, 0
    %1424 = vmatprep.subr.bf16.mxu0 0
    %1425 = vmatpush1.bf16.msra.mxu0 0
    %1426 = vmatprep.subr.bf16.mxu0 0
    %1427 = vmatpush1.bf16.msra.mxu0 0
    %1428 = vmatprep.subr.bf16.mxu0 0
    %1429 = vmatpush1.bf16.msra.mxu0 0
    %1430 = vmatprep.subr.bf16.mxu0 0
    %1431 = vmatpush1.bf16.msra.mxu0 0
    %1432 = vmatprep.subr.bf16.mxu0 0
    %1433 = vmatpush1.bf16.msra.mxu0 0
    %1434 = vmatprep.subr.bf16.mxu0 0
    %1435 = vmatpush1.bf16.msra.mxu0 0
    %1436 = vmatprep.subr.bf16.mxu0 0
    %1437 = vmatpush1.bf16.msra.mxu0 0
    %1438 = vmatprep.subr.bf16.mxu0 0
    %1439 = vmatpush1.bf16.msra.mxu0 %v1403
    %1440 = vmatprep.subr.bf16.mxu0 0
    %1441 = vmatpush2.bf16.msra.mxu0 0
    %1442 = vmatprep.subr.bf16.mxu0 0
    %1443 = vmatpush2.bf16.msra.mxu0 0
    %1444 = vmatprep.subr.bf16.mxu0 0
    %1445 = vmatpush2.bf16.msra.mxu0 0
    %1446 = vmatprep.subr.bf16.mxu0 0
    %1447 = vmatpush2.bf16.msra.mxu0 0
    %1448 = vmatprep.subr.bf16.mxu0 0
    %1449 = vmatpush2.bf16.msra.mxu0 0
    %1450 = vmatprep.subr.bf16.mxu0 0
    %1451 = vmatpush2.bf16.msra.mxu0 0
    %1452 = vmatprep.subr.bf16.mxu0 0
    %1453 = vmatpush2.bf16.msra.mxu0 0
    %1454 = vmatprep.subr.bf16.mxu0 0
    %1455 = vmatpush2.bf16.msra.mxu0 0
    %1456 = vmatprep.mubr.bf16.mxu0 0
    %1457 = vmatmul.mubr.bf16.gmra.mxu0 %v1413
    %v1458 = vpop.f32.mrf.mxu0
    %v1459 = vadd.f32 %v1410, %v1458
    %v1460 = vpop.f32.mrf.mxu0
    %v1461 = vpop.f32.mrf.mxu0
    %v1462 = vadd.f32 %v1410, %v1461
    %v1463 = vpop.f32.mrf.mxu0
    %1464 = vmatprep.mubr.bf16.mxu0 0
    %1465 = vmatmul.mubr.bf16.gmra.mxu0 %v1416
    %v1466 = vpop.f32.mrf.mxu0
    %v1467 = vadd.f32 %v1410, %v1466
    %v1468 = vpop.f32.mrf.mxu0
    %v1469 = vpop.f32.mrf.mxu0
    %v1470 = vadd.f32 %v1410, %v1469
    %v1471 = vpop.f32.mrf.mxu0
    %1472 = vmatprep.mubr.bf16.mxu0 0
    %1473 = vmatmul.mubr.bf16.gmra.mxu0 %v1419
    %v1474 = vpop.f32.mrf.mxu0
    %v1475 = vadd.f32 %v1410, %v1474
    %v1476 = vpop.f32.mrf.mxu0
    %v1477 = vpop.f32.mrf.mxu0
    %v1478 = vadd.f32 %v1410, %v1477
    %v1479 = vpop.f32.mrf.mxu0
    %1480 = vmatprep.mubr.bf16.mxu0 0
    %1481 = vmatmul.mubr.bf16.gmra.mxu0 %v1422
    %v1482 = vpop.f32.mrf.mxu0
    %v1483 = vadd.f32 %v1410, %v1482
    %v1484 = vpop.f32.mrf.mxu0
    %v1485 = vpop.f32.mrf.mxu0
    %v1486 = vadd.f32 %v1410, %v1485
    %v1487 = vpop.f32.mrf.mxu0
    %1488 = vdwg.mxu0
    %v1489 = vmul.f32 %v150, %v1459
    %v1490 = vmul.f32 %v151, %v1462
    %v1491 = vmul.f32 %v152, %v1467
    %v1492 = vmul.f32 %v153, %v1470
    %v1493 = vmul.f32 %v154, %v1475
    %v1494 = vmul.f32 %v155, %v1478
    %v1495 = vmul.f32 %v156, %v1483
    %v1496 = vmul.f32 %v157, %v1486
    %v1497 = vadd.f32 %v1489, %v1388
    %v1498 = vadd.f32 %v1490, %v1389
    %v1499 = vadd.f32 %v1491, %v1390
    %v1500 = vadd.f32 %v1492, %v1391
    %v1501 = vadd.f32 %v1493, %v1392
    %v1502 = vadd.f32 %v1494, %v1393
    %v1503 = vadd.f32 %v1495, %v1394
    %v1504 = vadd.f32 %v1496, %v1395
    %s1505 = scalar_lea.vmem %s13, 2
    %v1506 = vld [vmem:[%s1505] sm:$0x1]
    %s1507 = scalar_lea.vmem %s14, 2
    %v1508 = vld [vmem:[%s1507] sm:$0x1]
    %v1509 = vsel %vm172, %v1497, 0.0
    %1510 = vadd.xlane.f32.xlu0 %v1509
    %v1511 = vpop.xlane.xlu0 %1510
    %v1512 = vsel %vm172, %v1498, 0.0
    %1513 = vadd.xlane.f32.xlu0 %v1512
    %v1514 = vpop.xlane.xlu0 %1513
    %v1515 = vsel %vm172, %v1499, 0.0
    %1516 = vadd.xlane.f32.xlu0 %v1515
    %v1517 = vpop.xlane.xlu0 %1516
    %v1518 = vsel %vm172, %v1500, 0.0
    %1519 = vadd.xlane.f32.xlu0 %v1518
    %v1520 = vpop.xlane.xlu0 %1519
    %v1521 = vsel %vm172, %v1501, 0.0
    %1522 = vadd.xlane.f32.xlu0 %v1521
    %v1523 = vpop.xlane.xlu0 %1522
    %v1524 = vsel %vm172, %v1502, 0.0
    %1525 = vadd.xlane.f32.xlu0 %v1524
    %v1526 = vpop.xlane.xlu0 %1525
    %v1527 = vsel %vm172, %v1503, 0.0
    %1528 = vadd.xlane.f32.xlu0 %v1527
    %v1529 = vpop.xlane.xlu0 %1528
    %v1530 = vsel %vm172, %v1504, 0.0
    %1531 = vadd.xlane.f32.xlu0 %v1530
    %v1532 = vpop.xlane.xlu0 %1531
    %v1533 = vmul.f32 %v1511, %v1042
    %v1534 = vmul.f32 %v1514, %v1042
    %v1535 = vmul.f32 %v1517, %v1042
    %v1536 = vmul.f32 %v1520, %v1042
    %v1537 = vmul.f32 %v1523, %v1042
    %v1538 = vmul.f32 %v1526, %v1042
    %v1539 = vmul.f32 %v1529, %v1042
    %v1540 = vmul.f32 %v1532, %v1042
    %v1541 = vsub.f32 %v1497, %v1533
    %v1542 = vsub.f32 %v1498, %v1534
    %v1543 = vsub.f32 %v1499, %v1535
    %v1544 = vsub.f32 %v1500, %v1536
    %v1545 = vsub.f32 %v1501, %v1537
    %v1546 = vsub.f32 %v1502, %v1538
    %v1547 = vsub.f32 %v1503, %v1539
    %v1548 = vsub.f32 %v1504, %v1540
    %v1549 = vmul.f32 %v1541, %v1541
    %v1550 = vmul.f32 %v1542, %v1542
    %v1551 = vmul.f32 %v1543, %v1543
    %v1552 = vmul.f32 %v1544, %v1544
    %v1553 = vmul.f32 %v1545, %v1545
    %v1554 = vmul.f32 %v1546, %v1546
    %v1555 = vmul.f32 %v1547, %v1547
    %v1556 = vmul.f32 %v1548, %v1548
    %v1557 = vsel %vm172, %v1549, 0.0
    %1558 = vadd.xlane.f32.xlu0 %v1557
    %v1559 = vpop.xlane.xlu0 %1558
    %v1560 = vsel %vm172, %v1550, 0.0
    %1561 = vadd.xlane.f32.xlu0 %v1560
    %v1562 = vpop.xlane.xlu0 %1561
    %v1563 = vsel %vm172, %v1551, 0.0
    %1564 = vadd.xlane.f32.xlu0 %v1563
    %v1565 = vpop.xlane.xlu0 %1564
    %v1566 = vsel %vm172, %v1552, 0.0
    %1567 = vadd.xlane.f32.xlu0 %v1566
    %v1568 = vpop.xlane.xlu0 %1567
    %v1569 = vsel %vm172, %v1553, 0.0
    %1570 = vadd.xlane.f32.xlu0 %v1569
    %v1571 = vpop.xlane.xlu0 %1570
    %v1572 = vsel %vm172, %v1554, 0.0
    %1573 = vadd.xlane.f32.xlu0 %v1572
    %v1574 = vpop.xlane.xlu0 %1573
    %v1575 = vsel %vm172, %v1555, 0.0
    %1576 = vadd.xlane.f32.xlu0 %v1575
    %v1577 = vpop.xlane.xlu0 %1576
    %v1578 = vsel %vm172, %v1556, 0.0
    %1579 = vadd.xlane.f32.xlu0 %v1578
    %v1580 = vpop.xlane.xlu0 %1579
    %v1581 = vmul.f32 %v1559, %v1042
    %v1582 = vmul.f32 %v1562, %v1042
    %v1583 = vmul.f32 %v1565, %v1042
    %v1584 = vmul.f32 %v1568, %v1042
    %v1585 = vmul.f32 %v1571, %v1042
    %v1586 = vmul.f32 %v1574, %v1042
    %v1587 = vmul.f32 %v1577, %v1042
    %v1588 = vmul.f32 %v1580, %v1042
    %v1589 = vadd.f32 %v1581, 1e-05
    %v1590 = vadd.f32 %v1582, 1e-05
    %v1591 = vadd.f32 %v1583, 1e-05
    %v1592 = vadd.f32 %v1584, 1e-05
    %v1593 = vadd.f32 %v1585, 1e-05
    %v1594 = vadd.f32 %v1586, 1e-05
    %v1595 = vadd.f32 %v1587, 1e-05
    %v1596 = vadd.f32 %v1588, 1e-05
    %v1597 = vrsqrt.pop %v1589
    %v1598 = vrsqrt.pop %v1590
    %v1599 = vrsqrt.pop %v1591
    %v1600 = vrsqrt.pop %v1592
    %v1601 = vrsqrt.pop %v1593
    %v1602 = vrsqrt.pop %v1594
    %v1603 = vrsqrt.pop %v1595
    %v1604 = vrsqrt.pop %v1596
    %v1605 = vmul.f32 %v1541, %v1597
    %v1606 = vmul.f32 %v1542, %v1598
    %v1607 = vmul.f32 %v1543, %v1599
    %v1608 = vmul.f32 %v1544, %v1600
    %v1609 = vmul.f32 %v1545, %v1601
    %v1610 = vmul.f32 %v1546, %v1602
    %v1611 = vmul.f32 %v1547, %v1603
    %v1612 = vmul.f32 %v1548, %v1604
    %v1614 = vlaneseq
    %v1615 = vshrl.u32 %v1614, 7
    %v1616 = vsub.s32 0, %v1615
    %v1617 = vrot.slane %v1506, %v1616
    %v1619 = vmul.f32 %v1605, %v1617
    %v1620 = vmul.f32 %v1606, %v1617
    %v1621 = vmul.f32 %v1607, %v1617
    %v1622 = vmul.f32 %v1608, %v1617
    %v1623 = vmul.f32 %v1609, %v1617
    %v1624 = vmul.f32 %v1610, %v1617
    %v1625 = vmul.f32 %v1611, %v1617
    %v1626 = vmul.f32 %v1612, %v1617
    %v1628 = vlaneseq
    %v1629 = vshrl.u32 %v1628, 7
    %v1630 = vsub.s32 0, %v1629
    %v1631 = vrot.slane %v1508, %v1630
    %v1633 = vadd.f32 %v1619, %v1631
    %v1634 = vadd.f32 %v1620, %v1631
    %v1635 = vadd.f32 %v1621, %v1631
    %v1636 = vadd.f32 %v1622, %v1631
    %v1637 = vadd.f32 %v1623, %v1631
    %v1638 = vadd.f32 %v1624, %v1631
    %v1639 = vadd.f32 %v1625, %v1631
    %v1640 = vadd.f32 %v1626, %v1631
    %v1641 = vld [vmem:[%s15] sm:$0xff]
    %v1642 = vld [vmem:[%s15 + $0x8] sm:$0xff]
    %v1643 = vpack.c.bf16 %v1634, %v1633
    %v1644 = vpack.c.bf16 %v1636, %v1635
    %v1645 = vpack.c.bf16 %v1638, %v1637
    %v1646 = vpack.c.bf16 %v1640, %v1639
    %v1647 = vpack.c.bf16 %v1642, %v1641
    %v1648 = vld [vmem:[#allocation13] sm:$0xff]
    %v1649 = vld [vmem:[#allocation13 + $0x8] sm:$0xff]
    %v1650 = vld [vmem:[#allocation13 + $0x10] sm:$0xff]
    %v1651 = vld [vmem:[#allocation13 + $0x18] sm:$0xff]
    %v1652 = vld [vmem:[#allocation13 + $0x20] sm:$0xff]
    %v1653 = vld [vmem:[#allocation13 + $0x28] sm:$0xff]
    %v1654 = vld [vmem:[#allocation13 + $0x30] sm:$0xff]
    %v1655 = vld [vmem:[#allocation13 + $0x38] sm:$0xff]
    %v1656 = vld [vmem:[#allocation13 + $0x40] sm:$0xff]
    %v1657 = vld [vmem:[#allocation13 + $0x48] sm:$0xff]
    %v1658 = vld [vmem:[#allocation13 + $0x50] sm:$0xff]
    %v1659 = vld [vmem:[#allocation13 + $0x58] sm:$0xff]
    %v1660 = vld [vmem:[#allocation13 + $0x60] sm:$0xff]
    %v1661 = vld [vmem:[#allocation13 + $0x68] sm:$0xff]
    %v1662 = vld [vmem:[#allocation13 + $0x70] sm:$0xff]
    %v1663 = vld [vmem:[#allocation13 + $0x78] sm:$0xff]
    %v1664 = vpack.c.bf16 %v918, %v917
    %v1665 = vpack.c.bf16 %v920, %v919
    %v1666 = vpack.c.bf16 %v922, %v921
    %v1667 = vpack.c.bf16 %v924, %v923
    %v1668 = vpack.c.bf16 %v1649, %v1648
    %v1669 = vpack.c.bf16 %v1651, %v1650
    %v1670 = vpack.c.bf16 %v1653, %v1652
    %v1671 = vpack.c.bf16 %v1655, %v1654
    %v1672 = vpack.c.bf16 %v1657, %v1656
    %v1673 = vpack.c.bf16 %v1659, %v1658
    %v1674 = vpack.c.bf16 %v1661, %v1660
    %v1675 = vpack.c.bf16 %v1663, %v1662
    %1676 = vmatprep.subr.bf16.mxu0 0
    %1677 = vmatpush1.bf16.msra.mxu0 %v1675
    %1678 = vmatprep.subr.bf16.mxu0 0
    %1679 = vmatpush1.bf16.msra.mxu0 %v1674
    %1680 = vmatprep.subr.bf16.mxu0 0
    %1681 = vmatpush1.bf16.msra.mxu0 %v1673
    %1682 = vmatprep.subr.bf16.mxu0 0
    %1683 = vmatpush1.bf16.msra.mxu0 %v1672
    %1684 = vmatprep.subr.bf16.mxu0 0
    %1685 = vmatpush1.bf16.msra.mxu0 %v1671
    %1686 = vmatprep.subr.bf16.mxu0 0
    %1687 = vmatpush1.bf16.msra.mxu0 %v1670
    %1688 = vmatprep.subr.bf16.mxu0 0
    %1689 = vmatpush1.bf16.msra.mxu0 %v1669
    %1690 = vmatprep.subr.bf16.mxu0 0
    %1691 = vmatpush1.bf16.msra.mxu0 %v1668
    %1692 = vmatprep.subr.bf16.mxu0 0
    %1693 = vmatpush2.bf16.msra.mxu0 0
    %1694 = vmatprep.subr.bf16.mxu0 0
    %1695 = vmatpush2.bf16.msra.mxu0 0
    %1696 = vmatprep.subr.bf16.mxu0 0
    %1697 = vmatpush2.bf16.msra.mxu0 0
    %1698 = vmatprep.subr.bf16.mxu0 0
    %1699 = vmatpush2.bf16.msra.mxu0 0
    %1700 = vmatprep.subr.bf16.mxu0 0
    %1701 = vmatpush2.bf16.msra.mxu0 0
    %1702 = vmatprep.subr.bf16.mxu0 0
    %1703 = vmatpush2.bf16.msra.mxu0 0
    %1704 = vmatprep.subr.bf16.mxu0 0
    %1705 = vmatpush2.bf16.msra.mxu0 0
    %1706 = vmatprep.subr.bf16.mxu0 0
    %1707 = vmatpush2.bf16.msra.mxu0 0
    %1708 = vmatprep.mubr.bf16.mxu0 0
    %1709 = vmatmul.mubr.bf16.gmra.mxu0 %v1664
    %v1710 = vpop.f32.mrf.mxu0
    %v1711 = vadd.f32 0.0, %v1710
    %v1712 = vpop.f32.mrf.mxu0
    %v1713 = vpop.f32.mrf.mxu0
    %v1714 = vadd.f32 0.0, %v1713
    %v1715 = vpop.f32.mrf.mxu0
    %1716 = vmatprep.mubr.bf16.mxu0 0
    %1717 = vmatmul.mubr.bf16.gmra.mxu0 %v1665
    %v1718 = vpop.f32.mrf.mxu0
    %v1719 = vadd.f32 0.0, %v1718
    %v1720 = vpop.f32.mrf.mxu0
    %v1721 = vpop.f32.mrf.mxu0
    %v1722 = vadd.f32 0.0, %v1721
    %v1723 = vpop.f32.mrf.mxu0
    %1724 = vmatprep.mubr.bf16.mxu0 0
    %1725 = vmatmul.mubr.bf16.gmra.mxu0 %v1666
    %v1726 = vpop.f32.mrf.mxu0
    %v1727 = vadd.f32 0.0, %v1726
    %v1728 = vpop.f32.mrf.mxu0
    %v1729 = vpop.f32.mrf.mxu0
    %v1730 = vadd.f32 0.0, %v1729
    %v1731 = vpop.f32.mrf.mxu0
    %1732 = vmatprep.mubr.bf16.mxu0 0
    %1733 = vmatmul.mubr.bf16.gmra.mxu0 %v1667
    %v1734 = vpop.f32.mrf.mxu0
    %v1735 = vadd.f32 0.0, %v1734
    %v1736 = vpop.f32.mrf.mxu0
    %v1737 = vpop.f32.mrf.mxu0
    %v1738 = vadd.f32 0.0, %v1737
    %v1739 = vpop.f32.mrf.mxu0
    %1740 = vdwg.mxu0
    %v1742 = vsel %vm172, %v1643, 0
    %v1745 = vsel %vm172, %v1644, 0
    %v1748 = vsel %vm172, %v1645, 0
    %v1751 = vsel %vm172, %v1646, 0
    %1753 = vmatprep.subr.bf16.mxu0 0
    %1754 = vmatpush1.bf16.msra.mxu0 0
    %1755 = vmatprep.subr.bf16.mxu0 0
    %1756 = vmatpush1.bf16.msra.mxu0 0
    %1757 = vmatprep.subr.bf16.mxu0 0
    %1758 = vmatpush1.bf16.msra.mxu0 0
    %1759 = vmatprep.subr.bf16.mxu0 0
    %1760 = vmatpush1.bf16.msra.mxu0 0
    %1761 = vmatprep.subr.bf16.mxu0 0
    %1762 = vmatpush1.bf16.msra.mxu0 0
    %1763 = vmatprep.subr.bf16.mxu0 0
    %1764 = vmatpush1.bf16.msra.mxu0 0
    %1765 = vmatprep.subr.bf16.mxu0 0
    %1766 = vmatpush1.bf16.msra.mxu0 0
    %1767 = vmatprep.subr.bf16.mxu0 0
    %1768 = vmatpush1.bf16.msra.mxu0 %v1647
    %1769 = vmatprep.subr.bf16.mxu0 0
    %1770 = vmatpush2.bf16.msra.mxu0 0
    %1771 = vmatprep.subr.bf16.mxu0 0
    %1772 = vmatpush2.bf16.msra.mxu0 0
    %1773 = vmatprep.subr.bf16.mxu0 0
    %1774 = vmatpush2.bf16.msra.mxu0 0
    %1775 = vmatprep.subr.bf16.mxu0 0
    %1776 = vmatpush2.bf16.msra.mxu0 0
    %1777 = vmatprep.subr.bf16.mxu0 0
    %1778 = vmatpush2.bf16.msra.mxu0 0
    %1779 = vmatprep.subr.bf16.mxu0 0
    %1780 = vmatpush2.bf16.msra.mxu0 0
    %1781 = vmatprep.subr.bf16.mxu0 0
    %1782 = vmatpush2.bf16.msra.mxu0 0
    %1783 = vmatprep.subr.bf16.mxu0 0
    %1784 = vmatpush2.bf16.msra.mxu0 0
    %1785 = vmatprep.mubr.bf16.mxu0 0
    %1786 = vmatmul.mubr.bf16.gmra.mxu0 %v1742
    %v1787 = vpop.f32.mrf.mxu0
    %v1788 = vadd.f32 %v1711, %v1787
    %v1789 = vpop.f32.mrf.mxu0
    %v1790 = vpop.f32.mrf.mxu0
    %v1791 = vadd.f32 %v1714, %v1790
    %v1792 = vpop.f32.mrf.mxu0
    %1793 = vmatprep.mubr.bf16.mxu0 0
    %1794 = vmatmul.mubr.bf16.gmra.mxu0 %v1745
    %v1795 = vpop.f32.mrf.mxu0
    %v1796 = vadd.f32 %v1719, %v1795
    %v1797 = vpop.f32.mrf.mxu0
    %v1798 = vpop.f32.mrf.mxu0
    %v1799 = vadd.f32 %v1722, %v1798
    %v1800 = vpop.f32.mrf.mxu0
    %1801 = vmatprep.mubr.bf16.mxu0 0
    %1802 = vmatmul.mubr.bf16.gmra.mxu0 %v1748
    %v1803 = vpop.f32.mrf.mxu0
    %v1804 = vadd.f32 %v1727, %v1803
    %v1805 = vpop.f32.mrf.mxu0
    %v1806 = vpop.f32.mrf.mxu0
    %v1807 = vadd.f32 %v1730, %v1806
    %v1808 = vpop.f32.mrf.mxu0
    %1809 = vmatprep.mubr.bf16.mxu0 0
    %1810 = vmatmul.mubr.bf16.gmra.mxu0 %v1751
    %v1811 = vpop.f32.mrf.mxu0
    %v1812 = vadd.f32 %v1735, %v1811
    %v1813 = vpop.f32.mrf.mxu0
    %v1814 = vpop.f32.mrf.mxu0
    %v1815 = vadd.f32 %v1738, %v1814
    %v1816 = vpop.f32.mrf.mxu0
    %1817 = vdwg.mxu0
    %v1818 = vld [vmem:[%s17] sm:$0x1]
    %v1820 = vlaneseq
    %v1821 = vshrl.u32 %v1820, 7
    %v1822 = vsub.s32 0, %v1821
    %v1823 = vrot.slane %v1818, %v1822
    %v1825 = vadd.f32 %v1788, %v1823
    %v1826 = vadd.f32 %v1791, %v1823
    %v1827 = vadd.f32 %v1796, %v1823
    %v1828 = vadd.f32 %v1799, %v1823
    %v1829 = vadd.f32 %v1804, %v1823
    %v1830 = vadd.f32 %v1807, %v1823
    %v1831 = vadd.f32 %v1812, %v1823
    %v1832 = vadd.f32 %v1815, %v1823
    %v1833 = vxor.u32 %v1825, 2147483648
    %v1834 = vxor.u32 %v1826, 2147483648
    %v1835 = vxor.u32 %v1827, 2147483648
    %v1836 = vxor.u32 %v1828, 2147483648
    %v1837 = vxor.u32 %v1829, 2147483648
    %v1838 = vxor.u32 %v1830, 2147483648
    %v1839 = vxor.u32 %v1831, 2147483648
    %v1840 = vxor.u32 %v1832, 2147483648
    %v1841 = vmul.f32 %v1833, 1.442695
    %v1842 = vpow.pop %v1841
    %v1843 = vmul.f32 %v1834, 1.442695
    %v1844 = vpow.pop %v1843
    %v1845 = vmul.f32 %v1835, 1.442695
    %v1846 = vpow.pop %v1845
    %v1847 = vmul.f32 %v1836, 1.442695
    %v1848 = vpow.pop %v1847
    %v1849 = vmul.f32 %v1837, 1.442695
    %v1850 = vpow.pop %v1849
    %v1851 = vmul.f32 %v1838, 1.442695
    %v1852 = vpow.pop %v1851
    %v1853 = vmul.f32 %v1839, 1.442695
    %v1854 = vpow.pop %v1853
    %v1855 = vmul.f32 %v1840, 1.442695
    %v1856 = vpow.pop %v1855
    %v1857 = vadd.f32 %v1842, 1.0
    %v1858 = vadd.f32 %v1844, 1.0
    %v1859 = vadd.f32 %v1846, 1.0
    %v1860 = vadd.f32 %v1848, 1.0
    %v1861 = vadd.f32 %v1850, 1.0
    %v1862 = vadd.f32 %v1852, 1.0
    %v1863 = vadd.f32 %v1854, 1.0
    %v1864 = vadd.f32 %v1856, 1.0
    %v1865 = vrcp.pop %v1857
    %v1866 = vmul.f32 1.0, %v1865
    %v1867 = vrcp.pop %v1858
    %v1868 = vmul.f32 1.0, %v1867
    %v1869 = vrcp.pop %v1859
    %v1870 = vmul.f32 1.0, %v1869
    %v1871 = vrcp.pop %v1860
    %v1872 = vmul.f32 1.0, %v1871
    %v1873 = vrcp.pop %v1861
    %v1874 = vmul.f32 1.0, %v1873
    %v1875 = vrcp.pop %v1862
    %v1876 = vmul.f32 1.0, %v1875
    %v1877 = vrcp.pop %v1863
    %v1878 = vmul.f32 1.0, %v1877
    %v1879 = vrcp.pop %v1864
    %v1880 = vmul.f32 1.0, %v1879
    %1881 = vst [vmem:[#allocation14] sm:$0xff] %v1866
    %1882 = vst [vmem:[#allocation14 + $0x8] sm:$0xff] %v1868
    %1883 = vst [vmem:[#allocation14 + $0x10] sm:$0xff] %v1870
    %1884 = vst [vmem:[#allocation14 + $0x18] sm:$0xff] %v1872
    %1885 = vst [vmem:[#allocation14 + $0x20] sm:$0xff] %v1874
    %1886 = vst [vmem:[#allocation14 + $0x28] sm:$0xff] %v1876
    %1887 = vst [vmem:[#allocation14 + $0x30] sm:$0xff] %v1878
    %1888 = vst [vmem:[#allocation14 + $0x38] sm:$0xff] %v1880
    // Predicated region
    $region102: #{tpu_custom_call.1} parent=1 // pred_check
      _
    $region103: #{tpu_custom_call.1} parent=1 // pred_check_branch
      %1890 = sbr.rel (0) target = $region105
    $region104: #{tpu_custom_call.1} parent=1 // pred_region
      %s1892 = ssub.s32 1024, 1024
      %1893 = vsyncadd [#allocation4], %s1892
      %s1894 = sshll.u32 [#allocation14], 4
      %s1895 = int_to_ptr.vmem [resolvable:$true] %s1894
      %1900 = dma.vmem_to_hbm [thread:$0]  %s1895, 1024, %s18, [#allocation4], 128, 128, 8
    $region105: #{tpu_custom_call.1} parent=1 // pred_fallthru
      _
    // Predicated region
    $region106: #{tpu_custom_call.1} parent=1 // pred_check
      _
    $region107: #{tpu_custom_call.1} parent=1 // pred_check_branch
      %1902 = sbr.rel (0) target = $region109
    $region108: #{tpu_custom_call.1} parent=1 // pred_region
      %1903 = dma.done [#allocation4], 1024
    $region109: #{tpu_custom_call.1} parent=1 // pred_fallthru
      _
    %1904 = vsyncpa [#allocation3], 1
    %1905 = vsyncpa [#allocation6], 1
    %1906 = vsyncpa [#allocation9], 1
    %1907 = vsyncpa [#allocation12], 1
    %1908 = vsyncpa [#allocation4], 1

</llo_original>
